<compile_context>
chip_gen: v5e
topology: v5e:2x2
jax: 0.10.0
libtpu: 0.0.40
codegen_flags: <defaults>
</compile_context>

<pallas_src>
import functools

import jax
import jax.numpy as jnp
import numpy as np
from jax import lax
from jax.experimental import pallas as pl
from jax.experimental.pallas import tpu as pltpu


def _round_up(v, m):
    return (v + m - 1) // m * m


def make_rnn_kernel(num_layers, T, B_pad, H_pad):
    """Kernel body: layer-major, hoisted ih projection, serial hh recurrence."""

    def kernel(*refs):
        x_ref = refs[0]                                   # (T*B_pad, I_pad)
        layer_refs = refs[1:1 + 3 * num_layers]           # w_ih, w_hh, b per layer
        wfc_ref = refs[1 + 3 * num_layers]                # (H_pad, O_pad)
        bfc_ref = refs[2 + 3 * num_layers]                # (1, O_pad)
        out_ref = refs[3 + 3 * num_layers]                # (B_pad, O_pad)
        pre_ref = refs[4 + 3 * num_layers]                # (T*B_pad, H_pad) scratch
        hseq_ref = refs[5 + 3 * num_layers]               # (T*B_pad, H_pad) scratch

        w_ih_refs = [layer_refs[3 * l] for l in range(num_layers)]
        w_hh_refs = [layer_refs[3 * l + 1] for l in range(num_layers)]
        b_refs = [layer_refs[3 * l + 2] for l in range(num_layers)]

        h_last = jnp.zeros((B_pad, H_pad), jnp.float32)

        for l in range(num_layers):
            # Hoisted input projection: one MXU matmul over ALL timesteps
            # (M = T*B_pad), bias folded in once per layer (not per step).
            inp2d = x_ref[...] if l == 0 else hseq_ref[...]
            pre_ref[...] = (
                jnp.dot(inp2d, w_ih_refs[l][...],
                        preferred_element_type=jnp.float32)
                + b_refs[l][...]
            )

            last_layer = l == num_layers - 1

            # Serial recurrence: only h @ W_hh (K = H_pad) on the critical path.
            def step(t, h, _l=l, _last=last_layer):
                row = pl.multiple_of(t * B_pad, B_pad)
                h_new = jnp.tanh(
                    pre_ref[pl.ds(row, B_pad), :]
                    + jnp.dot(h, w_hh_refs[_l][...],
                              preferred_element_type=jnp.float32)
                )
                if not _last:
                    hseq_ref[pl.ds(row, B_pad), :] = h_new
                return h_new

            h_last = lax.fori_loop(
                0, T, step, jnp.zeros((B_pad, H_pad), jnp.float32),
                unroll=True)

        logits = (jnp.dot(h_last, wfc_ref[...],
                          preferred_element_type=jnp.float32)
                  + bfc_ref[...])
        out_ref[...] = 0.5 * (1.0 + logits)

    return kernel


def prepare_params(params, *, input_size, hidden_size, num_layers, output_size):
    """One-time padding/transpose of weights into kernel layout (hoisted out
    of the per-call forward).  Returns a flat tuple:
    (w_ih_0, w_hh_0, b_0, ..., w_fc, b_fc)."""
    I_pad = _round_up(max(input_size, 1), 128)
    H_pad = _round_up(max(hidden_size, 1), 128)
    O_pad = _round_up(max(output_size, 1), 128)

    prepped = []
    for l in range(num_layers):
        in_dim = input_size if l == 0 else hidden_size
        in_pad = I_pad if l == 0 else H_pad
        w_ih = jnp.zeros((in_pad, H_pad), jnp.float32)
        w_ih = w_ih.at[:in_dim, :hidden_size].set(
            params[f"w_ih_{l}"].T.astype(jnp.float32))
        w_hh = jnp.zeros((H_pad, H_pad), jnp.float32)
        w_hh = w_hh.at[:hidden_size, :hidden_size].set(
            params[f"w_hh_{l}"].T.astype(jnp.float32))
        b = jnp.zeros((1, H_pad), jnp.float32)
        b = b.at[0, :hidden_size].set(
            (params[f"b_ih_{l}"] + params[f"b_hh_{l}"]).astype(jnp.float32))
        prepped += [w_ih, w_hh, b]

    w_fc = jnp.zeros((H_pad, O_pad), jnp.float32)
    w_fc = w_fc.at[:hidden_size, :output_size].set(
        params["fc_w"].T.astype(jnp.float32))
    b_fc = jnp.zeros((1, O_pad), jnp.float32)
    b_fc = b_fc.at[0, :output_size].set(params["fc_b"].astype(jnp.float32))
    prepped += [w_fc, b_fc]
    return tuple(prepped)


def cursor_rnn_forward(x, prepped, *, hidden_size, num_layers, output_size):
    """x: (B, T, input_size) float32 (PyTorch batch_first convention).
    `prepped` comes from prepare_params()."""
    B, T, I = x.shape
    H, O = hidden_size, output_size

    B_pad = _round_up(max(B, 1), 8)
    I_pad = _round_up(max(I, 1), 128)
    H_pad = _round_up(max(H, 1), 128)
    O_pad = _round_up(max(O, 1), 128)

    # Time-major, zero-padded, then flattened to a 2D lane/sublane-dense slab.
    x_tbi = jnp.transpose(x, (1, 0, 2)).astype(jnp.float32)
    x_pad = jnp.zeros((T, B_pad, I_pad), jnp.float32)
    x_pad = x_pad.at[:, :B, :I].set(x_tbi)
    x_pad = x_pad.reshape(T * B_pad, I_pad)

    in_arrays = [x_pad, *prepped]

    def _full_spec(a):
        nd = a.ndim
        return pl.BlockSpec(a.shape, lambda i, _nd=nd: (0,) * _nd)

    in_specs = [_full_spec(a) for a in in_arrays]

    out_pad = pl.pallas_call(
        make_rnn_kernel(num_layers, T, B_pad, H_pad),
        out_shape=jax.ShapeDtypeStruct((B_pad, O_pad), jnp.float32),
        grid_spec=pltpu.PrefetchScalarGridSpec(
            num_scalar_prefetch=0,
            grid=(1,),                       # single invocation; loops in-kernel
            in_specs=in_specs,
            out_specs=pl.BlockSpec((B_pad, O_pad), lambda i: (0, 0)),
            scratch_shapes=[
                pltpu.VMEM((T * B_pad, H_pad), jnp.float32),   # hoisted ih pre
                pltpu.VMEM((T * B_pad, H_pad), jnp.float32),   # layer output seq
            ]),
        compiler_params=pltpu.CompilerParams(
            dimension_semantics=("arbitrary",)),
    )(*in_arrays)

    return out_pad[:B, :O]


def cursor_rnn_reference(x, params, *, hidden_size, num_layers, output_size):
    """Pure-JAX reference matching torch.nn.RNN semantics."""
    B, T, I = x.shape
    H = hidden_size
    h = [jnp.zeros((B, H), jnp.float32) for _ in range(num_layers)]
    last = None
    for t in range(T):
        inp = x[:, t, :]
        for l in range(num_layers):
            h[l] = jnp.tanh(inp @ params[f"w_ih_{l}"].T
                            + params[f"b_ih_{l}"]
                            + h[l] @ params[f"w_hh_{l}"].T
                            + params[f"b_hh_{l}"])
            inp = h[l]
        last = inp
    out = last @ params["fc_w"].T + params["fc_b"]
    return 0.5 * (1.0 + out)


def init_params(key, input_size, hidden_size, num_layers, output_size):
    """Deterministic uniform(-1/sqrt(H), 1/sqrt(H)) init (PyTorch scheme)."""
    params = {}
    bound = 1.0 / np.sqrt(hidden_size)
    for l in range(num_layers):
        in_dim = input_size if l == 0 else hidden_size
        key, k1, k2, k3, k4 = jax.random.split(key, 5)
        params[f"w_ih_{l}"] = jax.random.uniform(
            k1, (hidden_size, in_dim), jnp.float32, -bound, bound)
        params[f"w_hh_{l}"] = jax.random.uniform(
            k2, (hidden_size, hidden_size), jnp.float32, -bound, bound)
        params[f"b_ih_{l}"] = jax.random.uniform(
            k3, (hidden_size,), jnp.float32, -bound, bound)
        params[f"b_hh_{l}"] = jax.random.uniform(
            k4, (hidden_size,), jnp.float32, -bound, bound)
    key, k1, k2 = jax.random.split(key, 3)
    fc_bound = 1.0 / np.sqrt(hidden_size)
    params["fc_w"] = jax.random.uniform(
        k1, (output_size, hidden_size), jnp.float32, -fc_bound, fc_bound)
    params["fc_b"] = jax.random.uniform(
        k2, (output_size,), jnp.float32, -fc_bound, fc_bound)
    return params


if __name__ == "__main__":
    # Small shapes consistent with the module's forward.
    B, T = 2, 8
    input_size, hidden_size, num_layers, output_size = 4, 32, 2, 8

    key = jax.random.PRNGKey(0)
    key, kx, kp = jax.random.split(key, 3)
    x = jax.random.normal(kx, (B, T, input_size), jnp.float32)
    params = init_params(kp, input_size, hidden_size, num_layers, output_size)

    # One-time weight prep (padding/transpose hoisted out of the forward).
    prepped = prepare_params(params,
                             input_size=input_size,
                             hidden_size=hidden_size,
                             num_layers=num_layers,
                             output_size=output_size)

    fwd = jax.jit(functools.partial(cursor_rnn_forward,
                                    hidden_size=hidden_size,
                                    num_layers=num_layers,
                                    output_size=output_size))
    out = jax.block_until_ready(fwd(x, prepped))

    ref = jax.block_until_ready(
        cursor_rnn_reference(x, params,
                             hidden_size=hidden_size,
                             num_layers=num_layers,
                             output_size=output_size))

    assert out.shape == (B, output_size)
    np.testing.assert_allclose(np.asarray(out), np.asarray(ref),
                               rtol=1e-3, atol=1e-3)
    print("KERNEL_OK")
</pallas_src>

<mosaic_0001>
module attributes {stable_mosaic.version = 11 : i64} {
  func.func @kernel(%arg0: i32, %arg1: memref<64x128xf32, #tpu.memory_space<vmem>>, %arg2: memref<128x128xf32, #tpu.memory_space<vmem>>, %arg3: memref<128x128xf32, #tpu.memory_space<vmem>>, %arg4: memref<1x128xf32, #tpu.memory_space<vmem>>, %arg5: memref<128x128xf32, #tpu.memory_space<vmem>>, %arg6: memref<128x128xf32, #tpu.memory_space<vmem>>, %arg7: memref<1x128xf32, #tpu.memory_space<vmem>>, %arg8: memref<128x128xf32, #tpu.memory_space<vmem>>, %arg9: memref<1x128xf32, #tpu.memory_space<vmem>>, %arg10: memref<8x128xf32, #tpu.memory_space<vmem>>, %arg11: memref<64x128xf32, #tpu.memory_space<vmem>>, %arg12: memref<64x128xf32, #tpu.memory_space<vmem>>) attributes {dimension_semantics = [#tpu.dimension_semantics<arbitrary>], iteration_bounds = array<i64: 1>, scalar_prefetch = 0 : i64, scratch_operands = 2 : i64, tpu.core_type = #tpu.core_type<tc>, window_params = [{pipeline_mode = #tpu.pipeline_mode<synchronous>, transform_indices = @transform_0, window_bounds = array<i64: 64, 128>}, {pipeline_mode = #tpu.pipeline_mode<synchronous>, transform_indices = @transform_1, window_bounds = array<i64: 128, 128>}, {pipeline_mode = #tpu.pipeline_mode<synchronous>, transform_indices = @transform_2, window_bounds = array<i64: 128, 128>}, {pipeline_mode = #tpu.pipeline_mode<synchronous>, transform_indices = @transform_3, window_bounds = array<i64: 1, 128>}, {pipeline_mode = #tpu.pipeline_mode<synchronous>, transform_indices = @transform_4, window_bounds = array<i64: 128, 128>}, {pipeline_mode = #tpu.pipeline_mode<synchronous>, transform_indices = @transform_5, window_bounds = array<i64: 128, 128>}, {pipeline_mode = #tpu.pipeline_mode<synchronous>, transform_indices = @transform_6, window_bounds = array<i64: 1, 128>}, {pipeline_mode = #tpu.pipeline_mode<synchronous>, transform_indices = @transform_7, window_bounds = array<i64: 128, 128>}, {pipeline_mode = #tpu.pipeline_mode<synchronous>, transform_indices = @transform_8, window_bounds = array<i64: 1, 128>}, {pipeline_mode = #tpu.pipeline_mode<synchronous>, transform_indices = @transform_9, window_bounds = array<i64: 8, 128>}]} {
    %c0 = arith.constant 0 : index
    %c0_0 = arith.constant 0 : index
    %0 = vector.load %arg1[%c0, %c0_0] : memref<64x128xf32, #tpu.memory_space<vmem>>, vector<64x128xf32>
    %c0_1 = arith.constant 0 : index
    %c0_2 = arith.constant 0 : index
    %1 = vector.load %arg2[%c0_1, %c0_2] : memref<128x128xf32, #tpu.memory_space<vmem>>, vector<128x128xf32>
    %cst = arith.constant dense<0.000000e+00> : vector<64x128xf32>
    %2 = tpu.matmul %0, %1, %cst {dimension_numbers = #tpu.dot_dimension_numbers<[1], [0], [0], [1], [0, 0, 1, 1], [], []>} : vector<64x128xf32>, vector<128x128xf32>, vector<64x128xf32> -> vector<64x128xf32>
    %c0_3 = arith.constant 0 : index
    %c0_4 = arith.constant 0 : index
    %3 = vector.load %arg4[%c0_3, %c0_4] : memref<1x128xf32, #tpu.memory_space<vmem>>, vector<1x128xf32>
    %4 = vector.broadcast %3 : vector<1x128xf32> to vector<64x128xf32>
    %5 = arith.addf %2, %4 : vector<64x128xf32>
    %c0_5 = arith.constant 0 : index
    %c0_6 = arith.constant 0 : index
    %6 = vector.load %arg11[%c0_5, %c0_6] : memref<64x128xf32, #tpu.memory_space<vmem>>, vector<64x128xf32>
    tpu.vector_store %arg11[%c0_5, %c0_6], %5 {strides = array<i32>} : memref<64x128xf32, #tpu.memory_space<vmem>>, vector<64x128xf32>,
    %cst_7 = arith.constant 0.000000e+00 : f32
    %7 = vector.broadcast %cst_7 : f32 to vector<8x128xf32>
    %c0_i32 = arith.constant 0 : i32
    %c8_i32 = arith.constant 8 : i32
    %8 = arith.muli %c0_i32, %c8_i32 : i32
    %9 = tpu.assume_multiple %8, 8 : i32
    %10 = arith.index_cast %9 : i32 to index
    %c0_8 = arith.constant 0 : index
    %11 = vector.load %arg11[%10, %c0_8] : memref<64x128xf32, #tpu.memory_space<vmem>>, vector<8x128xf32>
    %c0_9 = arith.constant 0 : index
    %c0_10 = arith.constant 0 : index
    %12 = vector.load %arg3[%c0_9, %c0_10] : memref<128x128xf32, #tpu.memory_space<vmem>>, vector<128x128xf32>
    %cst_11 = arith.constant dense<0.000000e+00> : vector<8x128xf32>
    %13 = tpu.matmul %7, %12, %cst_11 {dimension_numbers = #tpu.dot_dimension_numbers<[1], [0], [0], [1], [0, 0, 1, 1], [], []>} : vector<8x128xf32>, vector<128x128xf32>, vector<8x128xf32> -> vector<8x128xf32>
    %14 = arith.addf %11, %13 : vector<8x128xf32>
    %15 = math.tanh %14 : vector<8x128xf32>
    %16 = arith.index_cast %9 : i32 to index
    %c0_12 = arith.constant 0 : index
    %17 = vector.load %arg12[%16, %c0_12] : memref<64x128xf32, #tpu.memory_space<vmem>>, vector<8x128xf32>
    tpu.vector_store %arg12[%16, %c0_12], %15 {strides = array<i32>} : memref<64x128xf32, #tpu.memory_space<vmem>>, vector<8x128xf32>,
    %c1_i32 = arith.constant 1 : i32
    %c8_i32_13 = arith.constant 8 : i32
    %18 = arith.muli %c1_i32, %c8_i32_13 : i32
    %19 = tpu.assume_multiple %18, 8 : i32
    %20 = arith.index_cast %19 : i32 to index
    %c0_14 = arith.constant 0 : index
    %21 = vector.load %arg11[%20, %c0_14] : memref<64x128xf32, #tpu.memory_space<vmem>>, vector<8x128xf32>
    %c0_15 = arith.constant 0 : index
    %c0_16 = arith.constant 0 : index
    %22 = vector.load %arg3[%c0_15, %c0_16] : memref<128x128xf32, #tpu.memory_space<vmem>>, vector<128x128xf32>
    %cst_17 = arith.constant dense<0.000000e+00> : vector<8x128xf32>
    %23 = tpu.matmul %15, %22, %cst_17 {dimension_numbers = #tpu.dot_dimension_numbers<[1], [0], [0], [1], [0, 0, 1, 1], [], []>} : vector<8x128xf32>, vector<128x128xf32>, vector<8x128xf32> -> vector<8x128xf32>
    %24 = arith.addf %21, %23 : vector<8x128xf32>
    %25 = math.tanh %24 : vector<8x128xf32>
    %26 = arith.index_cast %19 : i32 to index
    %c0_18 = arith.constant 0 : index
    %27 = vector.load %arg12[%26, %c0_18] : memref<64x128xf32, #tpu.memory_space<vmem>>, vector<8x128xf32>
    tpu.vector_store %arg12[%26, %c0_18], %25 {strides = array<i32>} : memref<64x128xf32, #tpu.memory_space<vmem>>, vector<8x128xf32>,
    %c2_i32 = arith.constant 2 : i32
    %c8_i32_19 = arith.constant 8 : i32
    %28 = arith.muli %c2_i32, %c8_i32_19 : i32
    %29 = tpu.assume_multiple %28, 8 : i32
    %30 = arith.index_cast %29 : i32 to index
    %c0_20 = arith.constant 0 : index
    %31 = vector.load %arg11[%30, %c0_20] : memref<64x128xf32, #tpu.memory_space<vmem>>, vector<8x128xf32>
    %c0_21 = arith.constant 0 : index
    %c0_22 = arith.constant 0 : index
    %32 = vector.load %arg3[%c0_21, %c0_22] : memref<128x128xf32, #tpu.memory_space<vmem>>, vector<128x128xf32>
    %cst_23 = arith.constant dense<0.000000e+00> : vector<8x128xf32>
    %33 = tpu.matmul %25, %32, %cst_23 {dimension_numbers = #tpu.dot_dimension_numbers<[1], [0], [0], [1], [0, 0, 1, 1], [], []>} : vector<8x128xf32>, vector<128x128xf32>, vector<8x128xf32> -> vector<8x128xf32>
    %34 = arith.addf %31, %33 : vector<8x128xf32>
    %35 = math.tanh %34 : vector<8x128xf32>
    %36 = arith.index_cast %29 : i32 to index
    %c0_24 = arith.constant 0 : index
    %37 = vector.load %arg12[%36, %c0_24] : memref<64x128xf32, #tpu.memory_space<vmem>>, vector<8x128xf32>
    tpu.vector_store %arg12[%36, %c0_24], %35 {strides = array<i32>} : memref<64x128xf32, #tpu.memory_space<vmem>>, vector<8x128xf32>,
    %c3_i32 = arith.constant 3 : i32
    %c8_i32_25 = arith.constant 8 : i32
    %38 = arith.muli %c3_i32, %c8_i32_25 : i32
    %39 = tpu.assume_multiple %38, 8 : i32
    %40 = arith.index_cast %39 : i32 to index
    %c0_26 = arith.constant 0 : index
    %41 = vector.load %arg11[%40, %c0_26] : memref<64x128xf32, #tpu.memory_space<vmem>>, vector<8x128xf32>
    %c0_27 = arith.constant 0 : index
    %c0_28 = arith.constant 0 : index
    %42 = vector.load %arg3[%c0_27, %c0_28] : memref<128x128xf32, #tpu.memory_space<vmem>>, vector<128x128xf32>
    %cst_29 = arith.constant dense<0.000000e+00> : vector<8x128xf32>
    %43 = tpu.matmul %35, %42, %cst_29 {dimension_numbers = #tpu.dot_dimension_numbers<[1], [0], [0], [1], [0, 0, 1, 1], [], []>} : vector<8x128xf32>, vector<128x128xf32>, vector<8x128xf32> -> vector<8x128xf32>
    %44 = arith.addf %41, %43 : vector<8x128xf32>
    %45 = math.tanh %44 : vector<8x128xf32>
    %46 = arith.index_cast %39 : i32 to index
    %c0_30 = arith.constant 0 : index
    %47 = vector.load %arg12[%46, %c0_30] : memref<64x128xf32, #tpu.memory_space<vmem>>, vector<8x128xf32>
    tpu.vector_store %arg12[%46, %c0_30], %45 {strides = array<i32>} : memref<64x128xf32, #tpu.memory_space<vmem>>, vector<8x128xf32>,
    %c4_i32 = arith.constant 4 : i32
    %c8_i32_31 = arith.constant 8 : i32
    %48 = arith.muli %c4_i32, %c8_i32_31 : i32
    %49 = tpu.assume_multiple %48, 8 : i32
    %50 = arith.index_cast %49 : i32 to index
    %c0_32 = arith.constant 0 : index
    %51 = vector.load %arg11[%50, %c0_32] : memref<64x128xf32, #tpu.memory_space<vmem>>, vector<8x128xf32>
    %c0_33 = arith.constant 0 : index
    %c0_34 = arith.constant 0 : index
    %52 = vector.load %arg3[%c0_33, %c0_34] : memref<128x128xf32, #tpu.memory_space<vmem>>, vector<128x128xf32>
    %cst_35 = arith.constant dense<0.000000e+00> : vector<8x128xf32>
    %53 = tpu.matmul %45, %52, %cst_35 {dimension_numbers = #tpu.dot_dimension_numbers<[1], [0], [0], [1], [0, 0, 1, 1], [], []>} : vector<8x128xf32>, vector<128x128xf32>, vector<8x128xf32> -> vector<8x128xf32>
    %54 = arith.addf %51, %53 : vector<8x128xf32>
    %55 = math.tanh %54 : vector<8x128xf32>
    %56 = arith.index_cast %49 : i32 to index
    %c0_36 = arith.constant 0 : index
    %57 = vector.load %arg12[%56, %c0_36] : memref<64x128xf32, #tpu.memory_space<vmem>>, vector<8x128xf32>
    tpu.vector_store %arg12[%56, %c0_36], %55 {strides = array<i32>} : memref<64x128xf32, #tpu.memory_space<vmem>>, vector<8x128xf32>,
    %c5_i32 = arith.constant 5 : i32
    %c8_i32_37 = arith.constant 8 : i32
    %58 = arith.muli %c5_i32, %c8_i32_37 : i32
    %59 = tpu.assume_multiple %58, 8 : i32
    %60 = arith.index_cast %59 : i32 to index
    %c0_38 = arith.constant 0 : index
    %61 = vector.load %arg11[%60, %c0_38] : memref<64x128xf32, #tpu.memory_space<vmem>>, vector<8x128xf32>
    %c0_39 = arith.constant 0 : index
    %c0_40 = arith.constant 0 : index
    %62 = vector.load %arg3[%c0_39, %c0_40] : memref<128x128xf32, #tpu.memory_space<vmem>>, vector<128x128xf32>
    %cst_41 = arith.constant dense<0.000000e+00> : vector<8x128xf32>
    %63 = tpu.matmul %55, %62, %cst_41 {dimension_numbers = #tpu.dot_dimension_numbers<[1], [0], [0], [1], [0, 0, 1, 1], [], []>} : vector<8x128xf32>, vector<128x128xf32>, vector<8x128xf32> -> vector<8x128xf32>
    %64 = arith.addf %61, %63 : vector<8x128xf32>
    %65 = math.tanh %64 : vector<8x128xf32>
    %66 = arith.index_cast %59 : i32 to index
    %c0_42 = arith.constant 0 : index
    %67 = vector.load %arg12[%66, %c0_42] : memref<64x128xf32, #tpu.memory_space<vmem>>, vector<8x128xf32>
    tpu.vector_store %arg12[%66, %c0_42], %65 {strides = array<i32>} : memref<64x128xf32, #tpu.memory_space<vmem>>, vector<8x128xf32>,
    %c6_i32 = arith.constant 6 : i32
    %c8_i32_43 = arith.constant 8 : i32
    %68 = arith.muli %c6_i32, %c8_i32_43 : i32
    %69 = tpu.assume_multiple %68, 8 : i32
    %70 = arith.index_cast %69 : i32 to index
    %c0_44 = arith.constant 0 : index
    %71 = vector.load %arg11[%70, %c0_44] : memref<64x128xf32, #tpu.memory_space<vmem>>, vector<8x128xf32>
    %c0_45 = arith.constant 0 : index
    %c0_46 = arith.constant 0 : index
    %72 = vector.load %arg3[%c0_45, %c0_46] : memref<128x128xf32, #tpu.memory_space<vmem>>, vector<128x128xf32>
    %cst_47 = arith.constant dense<0.000000e+00> : vector<8x128xf32>
    %73 = tpu.matmul %65, %72, %cst_47 {dimension_numbers = #tpu.dot_dimension_numbers<[1], [0], [0], [1], [0, 0, 1, 1], [], []>} : vector<8x128xf32>, vector<128x128xf32>, vector<8x128xf32> -> vector<8x128xf32>
    %74 = arith.addf %71, %73 : vector<8x128xf32>
    %75 = math.tanh %74 : vector<8x128xf32>
    %76 = arith.index_cast %69 : i32 to index
    %c0_48 = arith.constant 0 : index
    %77 = vector.load %arg12[%76, %c0_48] : memref<64x128xf32, #tpu.memory_space<vmem>>, vector<8x128xf32>
    tpu.vector_store %arg12[%76, %c0_48], %75 {strides = array<i32>} : memref<64x128xf32, #tpu.memory_space<vmem>>, vector<8x128xf32>,
    %c7_i32 = arith.constant 7 : i32
    %c8_i32_49 = arith.constant 8 : i32
    %78 = arith.muli %c7_i32, %c8_i32_49 : i32
    %79 = tpu.assume_multiple %78, 8 : i32
    %80 = arith.index_cast %79 : i32 to index
    %c0_50 = arith.constant 0 : index
    %81 = vector.load %arg11[%80, %c0_50] : memref<64x128xf32, #tpu.memory_space<vmem>>, vector<8x128xf32>
    %c0_51 = arith.constant 0 : index
    %c0_52 = arith.constant 0 : index
    %82 = vector.load %arg3[%c0_51, %c0_52] : memref<128x128xf32, #tpu.memory_space<vmem>>, vector<128x128xf32>
    %cst_53 = arith.constant dense<0.000000e+00> : vector<8x128xf32>
    %83 = tpu.matmul %75, %82, %cst_53 {dimension_numbers = #tpu.dot_dimension_numbers<[1], [0], [0], [1], [0, 0, 1, 1], [], []>} : vector<8x128xf32>, vector<128x128xf32>, vector<8x128xf32> -> vector<8x128xf32>
    %84 = arith.addf %81, %83 : vector<8x128xf32>
    %85 = math.tanh %84 : vector<8x128xf32>
    %86 = arith.index_cast %79 : i32 to index
    %c0_54 = arith.constant 0 : index
    %87 = vector.load %arg12[%86, %c0_54] : memref<64x128xf32, #tpu.memory_space<vmem>>, vector<8x128xf32>
    tpu.vector_store %arg12[%86, %c0_54], %85 {strides = array<i32>} : memref<64x128xf32, #tpu.memory_space<vmem>>, vector<8x128xf32>,
    %c8_i32_55 = arith.constant 8 : i32
    %c0_56 = arith.constant 0 : index
    %c0_57 = arith.constant 0 : index
    %88 = vector.load %arg12[%c0_56, %c0_57] : memref<64x128xf32, #tpu.memory_space<vmem>>, vector<64x128xf32>
    %c0_58 = arith.constant 0 : index
    %c0_59 = arith.constant 0 : index
    %89 = vector.load %arg5[%c0_58, %c0_59] : memref<128x128xf32, #tpu.memory_space<vmem>>, vector<128x128xf32>
    %cst_60 = arith.constant dense<0.000000e+00> : vector<64x128xf32>
    %90 = tpu.matmul %88, %89, %cst_60 {dimension_numbers = #tpu.dot_dimension_numbers<[1], [0], [0], [1], [0, 0, 1, 1], [], []>} : vector<64x128xf32>, vector<128x128xf32>, vector<64x128xf32> -> vector<64x128xf32>
    %c0_61 = arith.constant 0 : index
    %c0_62 = arith.constant 0 : index
    %91 = vector.load %arg7[%c0_61, %c0_62] : memref<1x128xf32, #tpu.memory_space<vmem>>, vector<1x128xf32>
    %92 = vector.broadcast %91 : vector<1x128xf32> to vector<64x128xf32>
    %93 = arith.addf %90, %92 : vector<64x128xf32>
    %c0_63 = arith.constant 0 : index
    %c0_64 = arith.constant 0 : index
    %94 = vector.load %arg11[%c0_63, %c0_64] : memref<64x128xf32, #tpu.memory_space<vmem>>, vector<64x128xf32>
    tpu.vector_store %arg11[%c0_63, %c0_64], %93 {strides = array<i32>} : memref<64x128xf32, #tpu.memory_space<vmem>>, vector<64x128xf32>,
    %cst_65 = arith.constant 0.000000e+00 : f32
    %95 = vector.broadcast %cst_65 : f32 to vector<8x128xf32>
    %c0_i32_66 = arith.constant 0 : i32
    %c8_i32_67 = arith.constant 8 : i32
    %96 = arith.muli %c0_i32_66, %c8_i32_67 : i32
    %97 = tpu.assume_multiple %96, 8 : i32
    %98 = arith.index_cast %97 : i32 to index
    %c0_68 = arith.constant 0 : index
    %99 = vector.load %arg11[%98, %c0_68] : memref<64x128xf32, #tpu.memory_space<vmem>>, vector<8x128xf32>
    %c0_69 = arith.constant 0 : index
    %c0_70 = arith.constant 0 : index
    %100 = vector.load %arg6[%c0_69, %c0_70] : memref<128x128xf32, #tpu.memory_space<vmem>>, vector<128x128xf32>
    %cst_71 = arith.constant dense<0.000000e+00> : vector<8x128xf32>
    %101 = tpu.matmul %95, %100, %cst_71 {dimension_numbers = #tpu.dot_dimension_numbers<[1], [0], [0], [1], [0, 0, 1, 1], [], []>} : vector<8x128xf32>, vector<128x128xf32>, vector<8x128xf32> -> vector<8x128xf32>
    %102 = arith.addf %99, %101 : vector<8x128xf32>
    %103 = math.tanh %102 : vector<8x128xf32>
    %c1_i32_72 = arith.constant 1 : i32
    %c8_i32_73 = arith.constant 8 : i32
    %104 = arith.muli %c1_i32_72, %c8_i32_73 : i32
    %105 = tpu.assume_multiple %104, 8 : i32
    %106 = arith.index_cast %105 : i32 to index
    %c0_74 = arith.constant 0 : index
    %107 = vector.load %arg11[%106, %c0_74] : memref<64x128xf32, #tpu.memory_space<vmem>>, vector<8x128xf32>
    %c0_75 = arith.constant 0 : index
    %c0_76 = arith.constant 0 : index
    %108 = vector.load %arg6[%c0_75, %c0_76] : memref<128x128xf32, #tpu.memory_space<vmem>>, vector<128x128xf32>
    %cst_77 = arith.constant dense<0.000000e+00> : vector<8x128xf32>
    %109 = tpu.matmul %103, %108, %cst_77 {dimension_numbers = #tpu.dot_dimension_numbers<[1], [0], [0], [1], [0, 0, 1, 1], [], []>} : vector<8x128xf32>, vector<128x128xf32>, vector<8x128xf32> -> vector<8x128xf32>
    %110 = arith.addf %107, %109 : vector<8x128xf32>
    %111 = math.tanh %110 : vector<8x128xf32>
    %c2_i32_78 = arith.constant 2 : i32
    %c8_i32_79 = arith.constant 8 : i32
    %112 = arith.muli %c2_i32_78, %c8_i32_79 : i32
    %113 = tpu.assume_multiple %112, 8 : i32
    %114 = arith.index_cast %113 : i32 to index
    %c0_80 = arith.constant 0 : index
    %115 = vector.load %arg11[%114, %c0_80] : memref<64x128xf32, #tpu.memory_space<vmem>>, vector<8x128xf32>
    %c0_81 = arith.constant 0 : index
    %c0_82 = arith.constant 0 : index
    %116 = vector.load %arg6[%c0_81, %c0_82] : memref<128x128xf32, #tpu.memory_space<vmem>>, vector<128x128xf32>
    %cst_83 = arith.constant dense<0.000000e+00> : vector<8x128xf32>
    %117 = tpu.matmul %111, %116, %cst_83 {dimension_numbers = #tpu.dot_dimension_numbers<[1], [0], [0], [1], [0, 0, 1, 1], [], []>} : vector<8x128xf32>, vector<128x128xf32>, vector<8x128xf32> -> vector<8x128xf32>
    %118 = arith.addf %115, %117 : vector<8x128xf32>
    %119 = math.tanh %118 : vector<8x128xf32>
    %c3_i32_84 = arith.constant 3 : i32
    %c8_i32_85 = arith.constant 8 : i32
    %120 = arith.muli %c3_i32_84, %c8_i32_85 : i32
    %121 = tpu.assume_multiple %120, 8 : i32
    %122 = arith.index_cast %121 : i32 to index
    %c0_86 = arith.constant 0 : index
    %123 = vector.load %arg11[%122, %c0_86] : memref<64x128xf32, #tpu.memory_space<vmem>>, vector<8x128xf32>
    %c0_87 = arith.constant 0 : index
    %c0_88 = arith.constant 0 : index
    %124 = vector.load %arg6[%c0_87, %c0_88] : memref<128x128xf32, #tpu.memory_space<vmem>>, vector<128x128xf32>
    %cst_89 = arith.constant dense<0.000000e+00> : vector<8x128xf32>
    %125 = tpu.matmul %119, %124, %cst_89 {dimension_numbers = #tpu.dot_dimension_numbers<[1], [0], [0], [1], [0, 0, 1, 1], [], []>} : vector<8x128xf32>, vector<128x128xf32>, vector<8x128xf32> -> vector<8x128xf32>
    %126 = arith.addf %123, %125 : vector<8x128xf32>
    %127 = math.tanh %126 : vector<8x128xf32>
    %c4_i32_90 = arith.constant 4 : i32
    %c8_i32_91 = arith.constant 8 : i32
    %128 = arith.muli %c4_i32_90, %c8_i32_91 : i32
    %129 = tpu.assume_multiple %128, 8 : i32
    %130 = arith.index_cast %129 : i32 to index
    %c0_92 = arith.constant 0 : index
    %131 = vector.load %arg11[%130, %c0_92] : memref<64x128xf32, #tpu.memory_space<vmem>>, vector<8x128xf32>
    %c0_93 = arith.constant 0 : index
    %c0_94 = arith.constant 0 : index
    %132 = vector.load %arg6[%c0_93, %c0_94] : memref<128x128xf32, #tpu.memory_space<vmem>>, vector<128x128xf32>
    %cst_95 = arith.constant dense<0.000000e+00> : vector<8x128xf32>
    %133 = tpu.matmul %127, %132, %cst_95 {dimension_numbers = #tpu.dot_dimension_numbers<[1], [0], [0], [1], [0, 0, 1, 1], [], []>} : vector<8x128xf32>, vector<128x128xf32>, vector<8x128xf32> -> vector<8x128xf32>
    %134 = arith.addf %131, %133 : vector<8x128xf32>
    %135 = math.tanh %134 : vector<8x128xf32>
    %c5_i32_96 = arith.constant 5 : i32
    %c8_i32_97 = arith.constant 8 : i32
    %136 = arith.muli %c5_i32_96, %c8_i32_97 : i32
    %137 = tpu.assume_multiple %136, 8 : i32
    %138 = arith.index_cast %137 : i32 to index
    %c0_98 = arith.constant 0 : index
    %139 = vector.load %arg11[%138, %c0_98] : memref<64x128xf32, #tpu.memory_space<vmem>>, vector<8x128xf32>
    %c0_99 = arith.constant 0 : index
    %c0_100 = arith.constant 0 : index
    %140 = vector.load %arg6[%c0_99, %c0_100] : memref<128x128xf32, #tpu.memory_space<vmem>>, vector<128x128xf32>
    %cst_101 = arith.constant dense<0.000000e+00> : vector<8x128xf32>
    %141 = tpu.matmul %135, %140, %cst_101 {dimension_numbers = #tpu.dot_dimension_numbers<[1], [0], [0], [1], [0, 0, 1, 1], [], []>} : vector<8x128xf32>, vector<128x128xf32>, vector<8x128xf32> -> vector<8x128xf32>
    %142 = arith.addf %139, %141 : vector<8x128xf32>
    %143 = math.tanh %142 : vector<8x128xf32>
    %c6_i32_102 = arith.constant 6 : i32
    %c8_i32_103 = arith.constant 8 : i32
    %144 = arith.muli %c6_i32_102, %c8_i32_103 : i32
    %145 = tpu.assume_multiple %144, 8 : i32
    %146 = arith.index_cast %145 : i32 to index
    %c0_104 = arith.constant 0 : index
    %147 = vector.load %arg11[%146, %c0_104] : memref<64x128xf32, #tpu.memory_space<vmem>>, vector<8x128xf32>
    %c0_105 = arith.constant 0 : index
    %c0_106 = arith.constant 0 : index
    %148 = vector.load %arg6[%c0_105, %c0_106] : memref<128x128xf32, #tpu.memory_space<vmem>>, vector<128x128xf32>
    %cst_107 = arith.constant dense<0.000000e+00> : vector<8x128xf32>
    %149 = tpu.matmul %143, %148, %cst_107 {dimension_numbers = #tpu.dot_dimension_numbers<[1], [0], [0], [1], [0, 0, 1, 1], [], []>} : vector<8x128xf32>, vector<128x128xf32>, vector<8x128xf32> -> vector<8x128xf32>
    %150 = arith.addf %147, %149 : vector<8x128xf32>
    %151 = math.tanh %150 : vector<8x128xf32>
    %c7_i32_108 = arith.constant 7 : i32
    %c8_i32_109 = arith.constant 8 : i32
    %152 = arith.muli %c7_i32_108, %c8_i32_109 : i32
    %153 = tpu.assume_multiple %152, 8 : i32
    %154 = arith.index_cast %153 : i32 to index
    %c0_110 = arith.constant 0 : index
    %155 = vector.load %arg11[%154, %c0_110] : memref<64x128xf32, #tpu.memory_space<vmem>>, vector<8x128xf32>
    %c0_111 = arith.constant 0 : index
    %c0_112 = arith.constant 0 : index
    %156 = vector.load %arg6[%c0_111, %c0_112] : memref<128x128xf32, #tpu.memory_space<vmem>>, vector<128x128xf32>
    %cst_113 = arith.constant dense<0.000000e+00> : vector<8x128xf32>
    %157 = tpu.matmul %151, %156, %cst_113 {dimension_numbers = #tpu.dot_dimension_numbers<[1], [0], [0], [1], [0, 0, 1, 1], [], []>} : vector<8x128xf32>, vector<128x128xf32>, vector<8x128xf32> -> vector<8x128xf32>
    %158 = arith.addf %155, %157 : vector<8x128xf32>
    %159 = math.tanh %158 : vector<8x128xf32>
    %c8_i32_114 = arith.constant 8 : i32
    %c0_115 = arith.constant 0 : index
    %c0_116 = arith.constant 0 : index
    %160 = vector.load %arg8[%c0_115, %c0_116] : memref<128x128xf32, #tpu.memory_space<vmem>>, vector<128x128xf32>
    %cst_117 = arith.constant dense<0.000000e+00> : vector<8x128xf32>
    %161 = tpu.matmul %159, %160, %cst_117 {dimension_numbers = #tpu.dot_dimension_numbers<[1], [0], [0], [1], [0, 0, 1, 1], [], []>} : vector<8x128xf32>, vector<128x128xf32>, vector<8x128xf32> -> vector<8x128xf32>
    %c0_118 = arith.constant 0 : index
    %c0_119 = arith.constant 0 : index
    %162 = vector.load %arg9[%c0_118, %c0_119] : memref<1x128xf32, #tpu.memory_space<vmem>>, vector<1x128xf32>
    %163 = vector.broadcast %162 : vector<1x128xf32> to vector<8x128xf32>
    %164 = arith.addf %161, %163 : vector<8x128xf32>
    %cst_120 = arith.constant 1.000000e+00 : f32
    %165 = vector.broadcast %cst_120 : f32 to vector<8x128xf32>
    %166 = arith.addf %165, %164 : vector<8x128xf32>
    %cst_121 = arith.constant 5.000000e-01 : f32
    %167 = vector.broadcast %cst_121 : f32 to vector<8x128xf32>
    %168 = arith.mulf %167, %166 : vector<8x128xf32>
    %c0_122 = arith.constant 0 : index
    %c0_123 = arith.constant 0 : index
    %169 = vector.load %arg10[%c0_122, %c0_123] : memref<8x128xf32, #tpu.memory_space<vmem>>, vector<8x128xf32>
    tpu.vector_store %arg10[%c0_122, %c0_123], %168 {strides = array<i32>} : memref<8x128xf32, #tpu.memory_space<vmem>>, vector<8x128xf32>,
    return
  }
  func.func @transform_0(%arg0: i32) -> (i32, i32) {
    %c0_i32 = arith.constant 0 : i32
    %c0_i32_0 = arith.constant 0 : i32
    %c0_i32_1 = arith.constant 0 : i32
    return %c0_i32, %c0_i32_0 : i32, i32
  }
  func.func @transform_1(%arg0: i32) -> (i32, i32) {
    %c0_i32 = arith.constant 0 : i32
    %c0_i32_0 = arith.constant 0 : i32
    %c0_i32_1 = arith.constant 0 : i32
    return %c0_i32, %c0_i32_0 : i32, i32
  }
  func.func @transform_2(%arg0: i32) -> (i32, i32) {
    %c0_i32 = arith.constant 0 : i32
    %c0_i32_0 = arith.constant 0 : i32
    %c0_i32_1 = arith.constant 0 : i32
    return %c0_i32, %c0_i32_0 : i32, i32
  }
  func.func @transform_3(%arg0: i32) -> (i32, i32) {
    %c0_i32 = arith.constant 0 : i32
    %c0_i32_0 = arith.constant 0 : i32
    %c0_i32_1 = arith.constant 0 : i32
    return %c0_i32, %c0_i32_0 : i32, i32
  }
  func.func @transform_4(%arg0: i32) -> (i32, i32) {
    %c0_i32 = arith.constant 0 : i32
    %c0_i32_0 = arith.constant 0 : i32
    %c0_i32_1 = arith.constant 0 : i32
    return %c0_i32, %c0_i32_0 : i32, i32
  }
  func.func @transform_5(%arg0: i32) -> (i32, i32) {
    %c0_i32 = arith.constant 0 : i32
    %c0_i32_0 = arith.constant 0 : i32
    %c0_i32_1 = arith.constant 0 : i32
    return %c0_i32, %c0_i32_0 : i32, i32
  }
  func.func @transform_6(%arg0: i32) -> (i32, i32) {
    %c0_i32 = arith.constant 0 : i32
    %c0_i32_0 = arith.constant 0 : i32
    %c0_i32_1 = arith.constant 0 : i32
    return %c0_i32, %c0_i32_0 : i32, i32
  }
  func.func @transform_7(%arg0: i32) -> (i32, i32) {
    %c0_i32 = arith.constant 0 : i32
    %c0_i32_0 = arith.constant 0 : i32
    %c0_i32_1 = arith.constant 0 : i32
    return %c0_i32, %c0_i32_0 : i32, i32
  }
  func.func @transform_8(%arg0: i32) -> (i32, i32) {
    %c0_i32 = arith.constant 0 : i32
    %c0_i32_0 = arith.constant 0 : i32
    %c0_i32_1 = arith.constant 0 : i32
    return %c0_i32, %c0_i32_0 : i32, i32
  }
  func.func @transform_9(%arg0: i32) -> (i32, i32) {
    %c0_i32 = arith.constant 0 : i32
    %c0_i32_0 = arith.constant 0 : i32
    %c0_i32_1 = arith.constant 0 : i32
    return %c0_i32, %c0_i32_0 : i32, i32
  }
}

</mosaic_0001>

<llo_original>
// kernel: cursor_rnn_forward.1
$region0: #{cursor_rnn_forward.1}
  #allocation0 [shape = 'u32[]', space=smem, size = 0x4, offset = 0x4, fixed_abs, tag = 'smem constant byte address 0x4 - core index']
  #allocation1 [shape = 'u32[72,128]{1,0:T(1,128)}', space=vmem, size = 0x9000, scoped, tag = 'internal scratch']
  #allocation2 [shape = 'f32[64,128]{1,0:T(8,128)}', space=vmem, size = 0x8000, scoped, tag = 'scratch operand']
  #allocation3 [shape = 'f32[64,128]{1,0:T(8,128)}', space=vmem, size = 0x8000, scoped, tag = 'scratch operand']
  %s0 = inlined_call_operand.vmem [shape: f32[64,128], index: 0, kind: input, shape index: {}]
  %s1 = inlined_call_operand.hbm [shape: f32[128,128], index: 1, kind: input, shape index: {}]
  %s2 = inlined_call_operand.hbm [shape: f32[128,128], index: 2, kind: input, shape index: {}]
  %s3 = inlined_call_operand.vmem [shape: f32[1,128], index: 3, kind: input, shape index: {}]
  %s4 = inlined_call_operand.hbm [shape: f32[128,128], index: 4, kind: input, shape index: {}]
  %s5 = inlined_call_operand.hbm [shape: f32[128,128], index: 5, kind: input, shape index: {}]
  %s6 = inlined_call_operand.vmem [shape: f32[1,128], index: 6, kind: input, shape index: {}]
  %s7 = inlined_call_operand.hbm [shape: f32[128,128], index: 7, kind: input, shape index: {}]
  %s8 = inlined_call_operand.vmem [shape: f32[1,128], index: 8, kind: input, shape index: {}]
  %s9 = inlined_call_operand.vmem [shape: f32[8,128], index: 9, kind: output, shape index: {}]
  %s10 = sld [smem:[#allocation0]]
  $region66: #{cursor_rnn_forward.1} parent=0
    _
  %s12 = ssub.s32 1, %s10
  %s13 = scalar_select 0, %s12, %s10
  $region1: #{cursor_rnn_forward.1} parent=0
    #allocation4 [shape = 'u8[65536]{0}', space=vmem, size = 0x10000, scoped, tag = 'input window, operand 1, single buffered']
    #allocation5 [shape = 's32[1]{0}', space=sflag, size = 0x4, scoped, tag = 'scoped memory for cursor_rnn_forward.1']
    #allocation6 [shape = 'u8[65536]{0}', space=vmem, size = 0x10000, scoped, tag = 'input window, operand 2, single buffered']
    #allocation7 [shape = 's32[1]{0}', space=sflag, size = 0x4, scoped, tag = 'scoped memory for cursor_rnn_forward.1']
    #allocation8 [shape = 'u8[65536]{0}', space=vmem, size = 0x10000, scoped, tag = 'input window, operand 4, single buffered']
    #allocation9 [shape = 'u8[65536]{0}', space=vmem, size = 0x10000, scoped, tag = 'input window, operand 5, single buffered']
    #allocation10 [shape = 's32[1]{0}', space=sflag, size = 0x4, scoped, tag = 'scoped memory for cursor_rnn_forward.1']
    #allocation11 [shape = 'u8[65536]{0}', space=vmem, size = 0x10000, scoped, tag = 'input window, operand 7, single buffered']
    %14 = vsyncpa [#allocation5], 0
    %15 = vsyncpa [#allocation7], 0
    %16 = vsyncpa [#allocation10], 0
    // Predicated region
    $region2: #{cursor_rnn_forward.1} parent=1 // pred_check
      _
    $region3: #{cursor_rnn_forward.1} parent=1 // pred_check_branch
      %18 = sbr.rel (0) target = $region5
    $region4: #{cursor_rnn_forward.1} parent=1 // pred_region
      _
    $region5: #{cursor_rnn_forward.1} parent=1 // pred_fallthru
      _
    // Predicated region
    $region6: #{cursor_rnn_forward.1} parent=1 // pred_check
      _
    $region7: #{cursor_rnn_forward.1} parent=1 // pred_check_branch
      %20 = sbr.rel (0) target = $region9
    $region8: #{cursor_rnn_forward.1} parent=1 // pred_region
      %22 = vsyncadd [#allocation5], 0
      %s23 = sshll.u32 %s1, 4
      %s24 = int_to_ptr.hbm [resolvable:$true] %s23
      %s25 = sshll.u32 [#allocation4], 4
      %s26 = int_to_ptr.vmem [resolvable:$true] %s25
      %31 = dma.hbm_to_vmem [thread:$0]  %s24, 2048, %s26, [#allocation5], 128, 128, 8
    $region9: #{cursor_rnn_forward.1} parent=1 // pred_fallthru
      _
    // Predicated region
    $region10: #{cursor_rnn_forward.1} parent=1 // pred_check
      _
    $region11: #{cursor_rnn_forward.1} parent=1 // pred_check_branch
      %33 = sbr.rel (0) target = $region13
    $region12: #{cursor_rnn_forward.1} parent=1 // pred_region
      %35 = vsyncadd [#allocation7], 0
      %s36 = sshll.u32 %s2, 4
      %s37 = int_to_ptr.hbm [resolvable:$true] %s36
      %s38 = sshll.u32 [#allocation6], 4
      %s39 = int_to_ptr.vmem [resolvable:$true] %s38
      %44 = dma.hbm_to_vmem [thread:$0]  %s37, 2048, %s39, [#allocation7], 128, 128, 8
    $region13: #{cursor_rnn_forward.1} parent=1 // pred_fallthru
      _
    // Predicated region
    $region14: #{cursor_rnn_forward.1} parent=1 // pred_check
      _
    $region15: #{cursor_rnn_forward.1} parent=1 // pred_check_branch
      %46 = sbr.rel (0) target = $region17
    $region16: #{cursor_rnn_forward.1} parent=1 // pred_region
      _
    $region17: #{cursor_rnn_forward.1} parent=1 // pred_fallthru
      _
    // Predicated region
    $region18: #{cursor_rnn_forward.1} parent=1 // pred_check
      _
    $region19: #{cursor_rnn_forward.1} parent=1 // pred_check_branch
      %48 = sbr.rel (0) target = $region21
    $region20: #{cursor_rnn_forward.1} parent=1 // pred_region
      %50 = vsyncadd [#allocation7], 0
      %s51 = sshll.u32 %s4, 4
      %s52 = int_to_ptr.hbm [resolvable:$true] %s51
      %s53 = sshll.u32 [#allocation8], 4
      %s54 = int_to_ptr.vmem [resolvable:$true] %s53
      %59 = dma.hbm_to_vmem [thread:$0]  %s52, 2048, %s54, [#allocation7], 128, 128, 8
    $region21: #{cursor_rnn_forward.1} parent=1 // pred_fallthru
      _
    // Predicated region
    $region22: #{cursor_rnn_forward.1} parent=1 // pred_check
      _
    $region23: #{cursor_rnn_forward.1} parent=1 // pred_check_branch
      %61 = sbr.rel (0) target = $region25
    $region24: #{cursor_rnn_forward.1} parent=1 // pred_region
      %63 = vsyncadd [#allocation10], 0
      %s64 = sshll.u32 %s5, 4
      %s65 = int_to_ptr.hbm [resolvable:$true] %s64
      %s66 = sshll.u32 [#allocation9], 4
      %s67 = int_to_ptr.vmem [resolvable:$true] %s66
      %72 = dma.hbm_to_vmem [thread:$0]  %s65, 2048, %s67, [#allocation10], 128, 128, 8
    $region25: #{cursor_rnn_forward.1} parent=1 // pred_fallthru
      _
    // Predicated region
    $region26: #{cursor_rnn_forward.1} parent=1 // pred_check
      _
    $region27: #{cursor_rnn_forward.1} parent=1 // pred_check_branch
      %74 = sbr.rel (0) target = $region29
    $region28: #{cursor_rnn_forward.1} parent=1 // pred_region
      _
    $region29: #{cursor_rnn_forward.1} parent=1 // pred_fallthru
      _
    // Predicated region
    $region30: #{cursor_rnn_forward.1} parent=1 // pred_check
      _
    $region31: #{cursor_rnn_forward.1} parent=1 // pred_check_branch
      %76 = sbr.rel (0) target = $region33
    $region32: #{cursor_rnn_forward.1} parent=1 // pred_region
      %78 = vsyncadd [#allocation10], 0
      %s79 = sshll.u32 %s7, 4
      %s80 = int_to_ptr.hbm [resolvable:$true] %s79
      %s81 = sshll.u32 [#allocation11], 4
      %s82 = int_to_ptr.vmem [resolvable:$true] %s81
      %87 = dma.hbm_to_vmem [thread:$0]  %s80, 2048, %s82, [#allocation10], 128, 128, 8
    $region33: #{cursor_rnn_forward.1} parent=1 // pred_fallthru
      _
    // Predicated region
    $region34: #{cursor_rnn_forward.1} parent=1 // pred_check
      _
    $region35: #{cursor_rnn_forward.1} parent=1 // pred_check_branch
      %89 = sbr.rel (0) target = $region37
    $region36: #{cursor_rnn_forward.1} parent=1 // pred_region
      _
    $region37: #{cursor_rnn_forward.1} parent=1 // pred_fallthru
      _
    // Predicated region
    $region38: #{cursor_rnn_forward.1} parent=1 // pred_check
      _
    $region39: #{cursor_rnn_forward.1} parent=1 // pred_check_branch
      %91 = sbr.rel (0) target = $region41
    $region40: #{cursor_rnn_forward.1} parent=1 // pred_region
      %93 = dma.done [#allocation5], 2048
    $region41: #{cursor_rnn_forward.1} parent=1 // pred_fallthru
      _
    // Predicated region
    $region42: #{cursor_rnn_forward.1} parent=1 // pred_check
      _
    $region43: #{cursor_rnn_forward.1} parent=1 // pred_check_branch
      %95 = sbr.rel (0) target = $region45
    $region44: #{cursor_rnn_forward.1} parent=1 // pred_region
      %97 = dma.done [#allocation7], 2048
    $region45: #{cursor_rnn_forward.1} parent=1 // pred_fallthru
      _
    // Predicated region
    $region46: #{cursor_rnn_forward.1} parent=1 // pred_check
      _
    $region47: #{cursor_rnn_forward.1} parent=1 // pred_check_branch
      %99 = sbr.rel (0) target = $region49
    $region48: #{cursor_rnn_forward.1} parent=1 // pred_region
      %101 = dma.done [#allocation7], 2048
    $region49: #{cursor_rnn_forward.1} parent=1 // pred_fallthru
      _
    // Predicated region
    $region50: #{cursor_rnn_forward.1} parent=1 // pred_check
      _
    $region51: #{cursor_rnn_forward.1} parent=1 // pred_check_branch
      %103 = sbr.rel (0) target = $region53
    $region52: #{cursor_rnn_forward.1} parent=1 // pred_region
      %105 = dma.done [#allocation10], 2048
    $region53: #{cursor_rnn_forward.1} parent=1 // pred_fallthru
      _
    // Predicated region
    $region54: #{cursor_rnn_forward.1} parent=1 // pred_check
      _
    $region55: #{cursor_rnn_forward.1} parent=1 // pred_check_branch
      %107 = sbr.rel (0) target = $region57
    $region56: #{cursor_rnn_forward.1} parent=1 // pred_region
      %109 = dma.done [#allocation10], 2048
    $region57: #{cursor_rnn_forward.1} parent=1 // pred_fallthru
      _
    %v110 = vld [vmem:[%s0] sm:$0xff]
    %v111 = vld [vmem:[%s0 + $0x8] sm:$0xff]
    %v112 = vld [vmem:[%s0 + $0x10] sm:$0xff]
    %v113 = vld [vmem:[%s0 + $0x18] sm:$0xff]
    %v114 = vld [vmem:[%s0 + $0x20] sm:$0xff]
    %v115 = vld [vmem:[%s0 + $0x28] sm:$0xff]
    %v116 = vld [vmem:[%s0 + $0x30] sm:$0xff]
    %v117 = vld [vmem:[%s0 + $0x38] sm:$0xff]
    %v118 = vld [vmem:[#allocation4] sm:$0xff]
    %v119 = vld [vmem:[#allocation4 + $0x8] sm:$0xff]
    %v120 = vld [vmem:[#allocation4 + $0x10] sm:$0xff]
    %v121 = vld [vmem:[#allocation4 + $0x18] sm:$0xff]
    %v122 = vld [vmem:[#allocation4 + $0x20] sm:$0xff]
    %v123 = vld [vmem:[#allocation4 + $0x28] sm:$0xff]
    %v124 = vld [vmem:[#allocation4 + $0x30] sm:$0xff]
    %v125 = vld [vmem:[#allocation4 + $0x38] sm:$0xff]
    %v126 = vld [vmem:[#allocation4 + $0x40] sm:$0xff]
    %v127 = vld [vmem:[#allocation4 + $0x48] sm:$0xff]
    %v128 = vld [vmem:[#allocation4 + $0x50] sm:$0xff]
    %v129 = vld [vmem:[#allocation4 + $0x58] sm:$0xff]
    %v130 = vld [vmem:[#allocation4 + $0x60] sm:$0xff]
    %v131 = vld [vmem:[#allocation4 + $0x68] sm:$0xff]
    %v132 = vld [vmem:[#allocation4 + $0x70] sm:$0xff]
    %v133 = vld [vmem:[#allocation4 + $0x78] sm:$0xff]
    %v134 = vld [vmem:[%s3] sm:$0x1]
    %v136 = vperm.slane %v134, 0
    %138 = vmatpush.msra.mxu0 %v133
    %139 = vmatpush.msra.mxu0 %v132
    %140 = vmatpush.msra.mxu0 %v131
    %141 = vmatpush.msra.mxu0 %v130
    %142 = vmatpush.msra.mxu0 %v129
    %143 = vmatpush.msra.mxu0 %v128
    %144 = vmatpush.msra.mxu0 %v127
    %145 = vmatpush.msra.mxu0 %v126
    %146 = vmatpush.msra.mxu0 %v125
    %147 = vmatpush.msra.mxu0 %v124
    %148 = vmatpush.msra.mxu0 %v123
    %149 = vmatpush.msra.mxu0 %v122
    %150 = vmatpush.msra.mxu0 %v121
    %151 = vmatpush.msra.mxu0 %v120
    %152 = vmatpush.msra.mxu0 %v119
    %153 = vmatpush.msra.mxu0 %v118
    %154 = vmatmul.f32.gmra.mxu0 %v110
    %v155 = vpop.f32.mrf.mxu0
    %v156 = vadd.f32 %v136, %v155
    %157 = vmatmul.f32.gmra.mxu0 %v111
    %v158 = vpop.f32.mrf.mxu0
    %v159 = vadd.f32 %v136, %v158
    %160 = vmatmul.f32.gmra.mxu0 %v112
    %v161 = vpop.f32.mrf.mxu0
    %v162 = vadd.f32 %v136, %v161
    %163 = vmatmul.f32.gmra.mxu0 %v113
    %v164 = vpop.f32.mrf.mxu0
    %v165 = vadd.f32 %v136, %v164
    %166 = vmatmul.f32.gmra.mxu0 %v114
    %v167 = vpop.f32.mrf.mxu0
    %v168 = vadd.f32 %v136, %v167
    %169 = vmatmul.f32.gmra.mxu0 %v115
    %v170 = vpop.f32.mrf.mxu0
    %v171 = vadd.f32 %v136, %v170
    %172 = vmatmul.f32.gmra.mxu0 %v116
    %v173 = vpop.f32.mrf.mxu0
    %v174 = vadd.f32 %v136, %v173
    %175 = vmatmul.f32.gmra.mxu0 %v117
    %v176 = vpop.f32.mrf.mxu0
    %v177 = vadd.f32 %v136, %v176
    %178 = vdwg.mxu0
    %179 = vst [vmem:[#allocation2] sm:$0xff] %v156
    %180 = vst [vmem:[#allocation2 + $0x8] sm:$0xff] %v159
    %181 = vst [vmem:[#allocation2 + $0x10] sm:$0xff] %v162
    %182 = vst [vmem:[#allocation2 + $0x18] sm:$0xff] %v165
    %183 = vst [vmem:[#allocation2 + $0x20] sm:$0xff] %v168
    %184 = vst [vmem:[#allocation2 + $0x28] sm:$0xff] %v171
    %185 = vst [vmem:[#allocation2 + $0x30] sm:$0xff] %v174
    %186 = vst [vmem:[#allocation2 + $0x38] sm:$0xff] %v177
    %v187 = vld [vmem:[#allocation2] sm:$0xff]
    %v188 = vld [vmem:[#allocation6] sm:$0xff]
    %v189 = vld [vmem:[#allocation6 + $0x8] sm:$0xff]
    %v190 = vld [vmem:[#allocation6 + $0x10] sm:$0xff]
    %v191 = vld [vmem:[#allocation6 + $0x18] sm:$0xff]
    %v192 = vld [vmem:[#allocation6 + $0x20] sm:$0xff]
    %v193 = vld [vmem:[#allocation6 + $0x28] sm:$0xff]
    %v194 = vld [vmem:[#allocation6 + $0x30] sm:$0xff]
    %v195 = vld [vmem:[#allocation6 + $0x38] sm:$0xff]
    %v196 = vld [vmem:[#allocation6 + $0x40] sm:$0xff]
    %v197 = vld [vmem:[#allocation6 + $0x48] sm:$0xff]
    %v198 = vld [vmem:[#allocation6 + $0x50] sm:$0xff]
    %v199 = vld [vmem:[#allocation6 + $0x58] sm:$0xff]
    %v200 = vld [vmem:[#allocation6 + $0x60] sm:$0xff]
    %v201 = vld [vmem:[#allocation6 + $0x68] sm:$0xff]
    %v202 = vld [vmem:[#allocation6 + $0x70] sm:$0xff]
    %v203 = vld [vmem:[#allocation6 + $0x78] sm:$0xff]
    %204 = vmatpush.msra.mxu0 %v203
    %205 = vmatpush.msra.mxu0 %v202
    %206 = vmatpush.msra.mxu0 %v201
    %207 = vmatpush.msra.mxu0 %v200
    %208 = vmatpush.msra.mxu0 %v199
    %209 = vmatpush.msra.mxu0 %v198
    %210 = vmatpush.msra.mxu0 %v197
    %211 = vmatpush.msra.mxu0 %v196
    %212 = vmatpush.msra.mxu0 %v195
    %213 = vmatpush.msra.mxu0 %v194
    %214 = vmatpush.msra.mxu0 %v193
    %215 = vmatpush.msra.mxu0 %v192
    %216 = vmatpush.msra.mxu0 %v191
    %217 = vmatpush.msra.mxu0 %v190
    %218 = vmatpush.msra.mxu0 %v189
    %219 = vmatpush.msra.mxu0 %v188
    %220 = vmatmul.f32.gmra.mxu0 0.0
    %v221 = vpop.f32.mrf.mxu0
    %v222 = vadd.f32 0.0, %v221
    %223 = vdwg.mxu0
    %v224 = vadd.f32 %v187, %v222
    %v225 = vtanh.pop %v224
    %226 = vst [vmem:[#allocation3] sm:$0xff] %v225
    %s227 = scalar_lea.vmem [#allocation2], 8
    %v228 = vld [vmem:[%s227] sm:$0xff]
    %v229 = vld [vmem:[#allocation6] sm:$0xff]
    %v230 = vld [vmem:[#allocation6 + $0x8] sm:$0xff]
    %v231 = vld [vmem:[#allocation6 + $0x10] sm:$0xff]
    %v232 = vld [vmem:[#allocation6 + $0x18] sm:$0xff]
    %v233 = vld [vmem:[#allocation6 + $0x20] sm:$0xff]
    %v234 = vld [vmem:[#allocation6 + $0x28] sm:$0xff]
    %v235 = vld [vmem:[#allocation6 + $0x30] sm:$0xff]
    %v236 = vld [vmem:[#allocation6 + $0x38] sm:$0xff]
    %v237 = vld [vmem:[#allocation6 + $0x40] sm:$0xff]
    %v238 = vld [vmem:[#allocation6 + $0x48] sm:$0xff]
    %v239 = vld [vmem:[#allocation6 + $0x50] sm:$0xff]
    %v240 = vld [vmem:[#allocation6 + $0x58] sm:$0xff]
    %v241 = vld [vmem:[#allocation6 + $0x60] sm:$0xff]
    %v242 = vld [vmem:[#allocation6 + $0x68] sm:$0xff]
    %v243 = vld [vmem:[#allocation6 + $0x70] sm:$0xff]
    %v244 = vld [vmem:[#allocation6 + $0x78] sm:$0xff]
    %245 = vmatpush.msra.mxu0 %v244
    %246 = vmatpush.msra.mxu0 %v243
    %247 = vmatpush.msra.mxu0 %v242
    %248 = vmatpush.msra.mxu0 %v241
    %249 = vmatpush.msra.mxu0 %v240
    %250 = vmatpush.msra.mxu0 %v239
    %251 = vmatpush.msra.mxu0 %v238
    %252 = vmatpush.msra.mxu0 %v237
    %253 = vmatpush.msra.mxu0 %v236
    %254 = vmatpush.msra.mxu0 %v235
    %255 = vmatpush.msra.mxu0 %v234
    %256 = vmatpush.msra.mxu0 %v233
    %257 = vmatpush.msra.mxu0 %v232
    %258 = vmatpush.msra.mxu0 %v231
    %259 = vmatpush.msra.mxu0 %v230
    %260 = vmatpush.msra.mxu0 %v229
    %261 = vmatmul.f32.gmra.mxu0 %v225
    %v262 = vpop.f32.mrf.mxu0
    %v263 = vadd.f32 0.0, %v262
    %264 = vdwg.mxu0
    %v265 = vadd.f32 %v228, %v263
    %v266 = vtanh.pop %v265
    %s267 = scalar_lea.vmem [#allocation3], 8
    %268 = vst [vmem:[%s267] sm:$0xff] %v266
    %s269 = scalar_lea.vmem [#allocation2], 16
    %v270 = vld [vmem:[%s269] sm:$0xff]
    %v271 = vld [vmem:[#allocation6] sm:$0xff]
    %v272 = vld [vmem:[#allocation6 + $0x8] sm:$0xff]
    %v273 = vld [vmem:[#allocation6 + $0x10] sm:$0xff]
    %v274 = vld [vmem:[#allocation6 + $0x18] sm:$0xff]
    %v275 = vld [vmem:[#allocation6 + $0x20] sm:$0xff]
    %v276 = vld [vmem:[#allocation6 + $0x28] sm:$0xff]
    %v277 = vld [vmem:[#allocation6 + $0x30] sm:$0xff]
    %v278 = vld [vmem:[#allocation6 + $0x38] sm:$0xff]
    %v279 = vld [vmem:[#allocation6 + $0x40] sm:$0xff]
    %v280 = vld [vmem:[#allocation6 + $0x48] sm:$0xff]
    %v281 = vld [vmem:[#allocation6 + $0x50] sm:$0xff]
    %v282 = vld [vmem:[#allocation6 + $0x58] sm:$0xff]
    %v283 = vld [vmem:[#allocation6 + $0x60] sm:$0xff]
    %v284 = vld [vmem:[#allocation6 + $0x68] sm:$0xff]
    %v285 = vld [vmem:[#allocation6 + $0x70] sm:$0xff]
    %v286 = vld [vmem:[#allocation6 + $0x78] sm:$0xff]
    %287 = vmatpush.msra.mxu0 %v286
    %288 = vmatpush.msra.mxu0 %v285
    %289 = vmatpush.msra.mxu0 %v284
    %290 = vmatpush.msra.mxu0 %v283
    %291 = vmatpush.msra.mxu0 %v282
    %292 = vmatpush.msra.mxu0 %v281
    %293 = vmatpush.msra.mxu0 %v280
    %294 = vmatpush.msra.mxu0 %v279
    %295 = vmatpush.msra.mxu0 %v278
    %296 = vmatpush.msra.mxu0 %v277
    %297 = vmatpush.msra.mxu0 %v276
    %298 = vmatpush.msra.mxu0 %v275
    %299 = vmatpush.msra.mxu0 %v274
    %300 = vmatpush.msra.mxu0 %v273
    %301 = vmatpush.msra.mxu0 %v272
    %302 = vmatpush.msra.mxu0 %v271
    %303 = vmatmul.f32.gmra.mxu0 %v266
    %v304 = vpop.f32.mrf.mxu0
    %v305 = vadd.f32 0.0, %v304
    %306 = vdwg.mxu0
    %v307 = vadd.f32 %v270, %v305
    %v308 = vtanh.pop %v307
    %s309 = scalar_lea.vmem [#allocation3], 16
    %310 = vst [vmem:[%s309] sm:$0xff] %v308
    %s311 = scalar_lea.vmem [#allocation2], 24
    %v312 = vld [vmem:[%s311] sm:$0xff]
    %v313 = vld [vmem:[#allocation6] sm:$0xff]
    %v314 = vld [vmem:[#allocation6 + $0x8] sm:$0xff]
    %v315 = vld [vmem:[#allocation6 + $0x10] sm:$0xff]
    %v316 = vld [vmem:[#allocation6 + $0x18] sm:$0xff]
    %v317 = vld [vmem:[#allocation6 + $0x20] sm:$0xff]
    %v318 = vld [vmem:[#allocation6 + $0x28] sm:$0xff]
    %v319 = vld [vmem:[#allocation6 + $0x30] sm:$0xff]
    %v320 = vld [vmem:[#allocation6 + $0x38] sm:$0xff]
    %v321 = vld [vmem:[#allocation6 + $0x40] sm:$0xff]
    %v322 = vld [vmem:[#allocation6 + $0x48] sm:$0xff]
    %v323 = vld [vmem:[#allocation6 + $0x50] sm:$0xff]
    %v324 = vld [vmem:[#allocation6 + $0x58] sm:$0xff]
    %v325 = vld [vmem:[#allocation6 + $0x60] sm:$0xff]
    %v326 = vld [vmem:[#allocation6 + $0x68] sm:$0xff]
    %v327 = vld [vmem:[#allocation6 + $0x70] sm:$0xff]
    %v328 = vld [vmem:[#allocation6 + $0x78] sm:$0xff]
    %329 = vmatpush.msra.mxu0 %v328
    %330 = vmatpush.msra.mxu0 %v327
    %331 = vmatpush.msra.mxu0 %v326
    %332 = vmatpush.msra.mxu0 %v325
    %333 = vmatpush.msra.mxu0 %v324
    %334 = vmatpush.msra.mxu0 %v323
    %335 = vmatpush.msra.mxu0 %v322
    %336 = vmatpush.msra.mxu0 %v321
    %337 = vmatpush.msra.mxu0 %v320
    %338 = vmatpush.msra.mxu0 %v319
    %339 = vmatpush.msra.mxu0 %v318
    %340 = vmatpush.msra.mxu0 %v317
    %341 = vmatpush.msra.mxu0 %v316
    %342 = vmatpush.msra.mxu0 %v315
    %343 = vmatpush.msra.mxu0 %v314
    %344 = vmatpush.msra.mxu0 %v313
    %345 = vmatmul.f32.gmra.mxu0 %v308
    %v346 = vpop.f32.mrf.mxu0
    %v347 = vadd.f32 0.0, %v346
    %348 = vdwg.mxu0
    %v349 = vadd.f32 %v312, %v347
    %v350 = vtanh.pop %v349
    %s351 = scalar_lea.vmem [#allocation3], 24
    %352 = vst [vmem:[%s351] sm:$0xff] %v350
    %s353 = scalar_lea.vmem [#allocation2], 32
    %v354 = vld [vmem:[%s353] sm:$0xff]
    %v355 = vld [vmem:[#allocation6] sm:$0xff]
    %v356 = vld [vmem:[#allocation6 + $0x8] sm:$0xff]
    %v357 = vld [vmem:[#allocation6 + $0x10] sm:$0xff]
    %v358 = vld [vmem:[#allocation6 + $0x18] sm:$0xff]
    %v359 = vld [vmem:[#allocation6 + $0x20] sm:$0xff]
    %v360 = vld [vmem:[#allocation6 + $0x28] sm:$0xff]
    %v361 = vld [vmem:[#allocation6 + $0x30] sm:$0xff]
    %v362 = vld [vmem:[#allocation6 + $0x38] sm:$0xff]
    %v363 = vld [vmem:[#allocation6 + $0x40] sm:$0xff]
    %v364 = vld [vmem:[#allocation6 + $0x48] sm:$0xff]
    %v365 = vld [vmem:[#allocation6 + $0x50] sm:$0xff]
    %v366 = vld [vmem:[#allocation6 + $0x58] sm:$0xff]
    %v367 = vld [vmem:[#allocation6 + $0x60] sm:$0xff]
    %v368 = vld [vmem:[#allocation6 + $0x68] sm:$0xff]
    %v369 = vld [vmem:[#allocation6 + $0x70] sm:$0xff]
    %v370 = vld [vmem:[#allocation6 + $0x78] sm:$0xff]
    %371 = vmatpush.msra.mxu0 %v370
    %372 = vmatpush.msra.mxu0 %v369
    %373 = vmatpush.msra.mxu0 %v368
    %374 = vmatpush.msra.mxu0 %v367
    %375 = vmatpush.msra.mxu0 %v366
    %376 = vmatpush.msra.mxu0 %v365
    %377 = vmatpush.msra.mxu0 %v364
    %378 = vmatpush.msra.mxu0 %v363
    %379 = vmatpush.msra.mxu0 %v362
    %380 = vmatpush.msra.mxu0 %v361
    %381 = vmatpush.msra.mxu0 %v360
    %382 = vmatpush.msra.mxu0 %v359
    %383 = vmatpush.msra.mxu0 %v358
    %384 = vmatpush.msra.mxu0 %v357
    %385 = vmatpush.msra.mxu0 %v356
    %386 = vmatpush.msra.mxu0 %v355
    %387 = vmatmul.f32.gmra.mxu0 %v350
    %v388 = vpop.f32.mrf.mxu0
    %v389 = vadd.f32 0.0, %v388
    %390 = vdwg.mxu0
    %v391 = vadd.f32 %v354, %v389
    %v392 = vtanh.pop %v391
    %s393 = scalar_lea.vmem [#allocation3], 32
    %394 = vst [vmem:[%s393] sm:$0xff] %v392
    %s395 = scalar_lea.vmem [#allocation2], 40
    %v396 = vld [vmem:[%s395] sm:$0xff]
    %v397 = vld [vmem:[#allocation6] sm:$0xff]
    %v398 = vld [vmem:[#allocation6 + $0x8] sm:$0xff]
    %v399 = vld [vmem:[#allocation6 + $0x10] sm:$0xff]
    %v400 = vld [vmem:[#allocation6 + $0x18] sm:$0xff]
    %v401 = vld [vmem:[#allocation6 + $0x20] sm:$0xff]
    %v402 = vld [vmem:[#allocation6 + $0x28] sm:$0xff]
    %v403 = vld [vmem:[#allocation6 + $0x30] sm:$0xff]
    %v404 = vld [vmem:[#allocation6 + $0x38] sm:$0xff]
    %v405 = vld [vmem:[#allocation6 + $0x40] sm:$0xff]
    %v406 = vld [vmem:[#allocation6 + $0x48] sm:$0xff]
    %v407 = vld [vmem:[#allocation6 + $0x50] sm:$0xff]
    %v408 = vld [vmem:[#allocation6 + $0x58] sm:$0xff]
    %v409 = vld [vmem:[#allocation6 + $0x60] sm:$0xff]
    %v410 = vld [vmem:[#allocation6 + $0x68] sm:$0xff]
    %v411 = vld [vmem:[#allocation6 + $0x70] sm:$0xff]
    %v412 = vld [vmem:[#allocation6 + $0x78] sm:$0xff]
    %413 = vmatpush.msra.mxu0 %v412
    %414 = vmatpush.msra.mxu0 %v411
    %415 = vmatpush.msra.mxu0 %v410
    %416 = vmatpush.msra.mxu0 %v409
    %417 = vmatpush.msra.mxu0 %v408
    %418 = vmatpush.msra.mxu0 %v407
    %419 = vmatpush.msra.mxu0 %v406
    %420 = vmatpush.msra.mxu0 %v405
    %421 = vmatpush.msra.mxu0 %v404
    %422 = vmatpush.msra.mxu0 %v403
    %423 = vmatpush.msra.mxu0 %v402
    %424 = vmatpush.msra.mxu0 %v401
    %425 = vmatpush.msra.mxu0 %v400
    %426 = vmatpush.msra.mxu0 %v399
    %427 = vmatpush.msra.mxu0 %v398
    %428 = vmatpush.msra.mxu0 %v397
    %429 = vmatmul.f32.gmra.mxu0 %v392
    %v430 = vpop.f32.mrf.mxu0
    %v431 = vadd.f32 0.0, %v430
    %432 = vdwg.mxu0
    %v433 = vadd.f32 %v396, %v431
    %v434 = vtanh.pop %v433
    %s435 = scalar_lea.vmem [#allocation3], 40
    %436 = vst [vmem:[%s435] sm:$0xff] %v434
    %s437 = scalar_lea.vmem [#allocation2], 48
    %v438 = vld [vmem:[%s437] sm:$0xff]
    %v439 = vld [vmem:[#allocation6] sm:$0xff]
    %v440 = vld [vmem:[#allocation6 + $0x8] sm:$0xff]
    %v441 = vld [vmem:[#allocation6 + $0x10] sm:$0xff]
    %v442 = vld [vmem:[#allocation6 + $0x18] sm:$0xff]
    %v443 = vld [vmem:[#allocation6 + $0x20] sm:$0xff]
    %v444 = vld [vmem:[#allocation6 + $0x28] sm:$0xff]
    %v445 = vld [vmem:[#allocation6 + $0x30] sm:$0xff]
    %v446 = vld [vmem:[#allocation6 + $0x38] sm:$0xff]
    %v447 = vld [vmem:[#allocation6 + $0x40] sm:$0xff]
    %v448 = vld [vmem:[#allocation6 + $0x48] sm:$0xff]
    %v449 = vld [vmem:[#allocation6 + $0x50] sm:$0xff]
    %v450 = vld [vmem:[#allocation6 + $0x58] sm:$0xff]
    %v451 = vld [vmem:[#allocation6 + $0x60] sm:$0xff]
    %v452 = vld [vmem:[#allocation6 + $0x68] sm:$0xff]
    %v453 = vld [vmem:[#allocation6 + $0x70] sm:$0xff]
    %v454 = vld [vmem:[#allocation6 + $0x78] sm:$0xff]
    %455 = vmatpush.msra.mxu0 %v454
    %456 = vmatpush.msra.mxu0 %v453
    %457 = vmatpush.msra.mxu0 %v452
    %458 = vmatpush.msra.mxu0 %v451
    %459 = vmatpush.msra.mxu0 %v450
    %460 = vmatpush.msra.mxu0 %v449
    %461 = vmatpush.msra.mxu0 %v448
    %462 = vmatpush.msra.mxu0 %v447
    %463 = vmatpush.msra.mxu0 %v446
    %464 = vmatpush.msra.mxu0 %v445
    %465 = vmatpush.msra.mxu0 %v444
    %466 = vmatpush.msra.mxu0 %v443
    %467 = vmatpush.msra.mxu0 %v442
    %468 = vmatpush.msra.mxu0 %v441
    %469 = vmatpush.msra.mxu0 %v440
    %470 = vmatpush.msra.mxu0 %v439
    %471 = vmatmul.f32.gmra.mxu0 %v434
    %v472 = vpop.f32.mrf.mxu0
    %v473 = vadd.f32 0.0, %v472
    %474 = vdwg.mxu0
    %v475 = vadd.f32 %v438, %v473
    %v476 = vtanh.pop %v475
    %s477 = scalar_lea.vmem [#allocation3], 48
    %478 = vst [vmem:[%s477] sm:$0xff] %v476
    %s479 = scalar_lea.vmem [#allocation2], 56
    %v480 = vld [vmem:[%s479] sm:$0xff]
    %v481 = vld [vmem:[#allocation6] sm:$0xff]
    %v482 = vld [vmem:[#allocation6 + $0x8] sm:$0xff]
    %v483 = vld [vmem:[#allocation6 + $0x10] sm:$0xff]
    %v484 = vld [vmem:[#allocation6 + $0x18] sm:$0xff]
    %v485 = vld [vmem:[#allocation6 + $0x20] sm:$0xff]
    %v486 = vld [vmem:[#allocation6 + $0x28] sm:$0xff]
    %v487 = vld [vmem:[#allocation6 + $0x30] sm:$0xff]
    %v488 = vld [vmem:[#allocation6 + $0x38] sm:$0xff]
    %v489 = vld [vmem:[#allocation6 + $0x40] sm:$0xff]
    %v490 = vld [vmem:[#allocation6 + $0x48] sm:$0xff]
    %v491 = vld [vmem:[#allocation6 + $0x50] sm:$0xff]
    %v492 = vld [vmem:[#allocation6 + $0x58] sm:$0xff]
    %v493 = vld [vmem:[#allocation6 + $0x60] sm:$0xff]
    %v494 = vld [vmem:[#allocation6 + $0x68] sm:$0xff]
    %v495 = vld [vmem:[#allocation6 + $0x70] sm:$0xff]
    %v496 = vld [vmem:[#allocation6 + $0x78] sm:$0xff]
    %497 = vmatpush.msra.mxu0 %v496
    %498 = vmatpush.msra.mxu0 %v495
    %499 = vmatpush.msra.mxu0 %v494
    %500 = vmatpush.msra.mxu0 %v493
    %501 = vmatpush.msra.mxu0 %v492
    %502 = vmatpush.msra.mxu0 %v491
    %503 = vmatpush.msra.mxu0 %v490
    %504 = vmatpush.msra.mxu0 %v489
    %505 = vmatpush.msra.mxu0 %v488
    %506 = vmatpush.msra.mxu0 %v487
    %507 = vmatpush.msra.mxu0 %v486
    %508 = vmatpush.msra.mxu0 %v485
    %509 = vmatpush.msra.mxu0 %v484
    %510 = vmatpush.msra.mxu0 %v483
    %511 = vmatpush.msra.mxu0 %v482
    %512 = vmatpush.msra.mxu0 %v481
    %513 = vmatmul.f32.gmra.mxu0 %v476
    %v514 = vpop.f32.mrf.mxu0
    %v515 = vadd.f32 0.0, %v514
    %516 = vdwg.mxu0
    %v517 = vadd.f32 %v480, %v515
    %v518 = vtanh.pop %v517
    %s519 = scalar_lea.vmem [#allocation3], 56
    %520 = vst [vmem:[%s519] sm:$0xff] %v518
    %v521 = vld [vmem:[#allocation3] sm:$0xff]
    %v522 = vld [vmem:[#allocation3 + $0x8] sm:$0xff]
    %v523 = vld [vmem:[#allocation3 + $0x10] sm:$0xff]
    %v524 = vld [vmem:[#allocation3 + $0x18] sm:$0xff]
    %v525 = vld [vmem:[#allocation3 + $0x20] sm:$0xff]
    %v526 = vld [vmem:[#allocation3 + $0x28] sm:$0xff]
    %v527 = vld [vmem:[#allocation3 + $0x30] sm:$0xff]
    %v528 = vld [vmem:[#allocation3 + $0x38] sm:$0xff]
    %v529 = vld [vmem:[#allocation8] sm:$0xff]
    %v530 = vld [vmem:[#allocation8 + $0x8] sm:$0xff]
    %v531 = vld [vmem:[#allocation8 + $0x10] sm:$0xff]
    %v532 = vld [vmem:[#allocation8 + $0x18] sm:$0xff]
    %v533 = vld [vmem:[#allocation8 + $0x20] sm:$0xff]
    %v534 = vld [vmem:[#allocation8 + $0x28] sm:$0xff]
    %v535 = vld [vmem:[#allocation8 + $0x30] sm:$0xff]
    %v536 = vld [vmem:[#allocation8 + $0x38] sm:$0xff]
    %v537 = vld [vmem:[#allocation8 + $0x40] sm:$0xff]
    %v538 = vld [vmem:[#allocation8 + $0x48] sm:$0xff]
    %v539 = vld [vmem:[#allocation8 + $0x50] sm:$0xff]
    %v540 = vld [vmem:[#allocation8 + $0x58] sm:$0xff]
    %v541 = vld [vmem:[#allocation8 + $0x60] sm:$0xff]
    %v542 = vld [vmem:[#allocation8 + $0x68] sm:$0xff]
    %v543 = vld [vmem:[#allocation8 + $0x70] sm:$0xff]
    %v544 = vld [vmem:[#allocation8 + $0x78] sm:$0xff]
    %v545 = vld [vmem:[%s6] sm:$0x1]
    %v547 = vperm.slane %v545, 0
    %549 = vmatpush.msra.mxu0 %v544
    %550 = vmatpush.msra.mxu0 %v543
    %551 = vmatpush.msra.mxu0 %v542
    %552 = vmatpush.msra.mxu0 %v541
    %553 = vmatpush.msra.mxu0 %v540
    %554 = vmatpush.msra.mxu0 %v539
    %555 = vmatpush.msra.mxu0 %v538
    %556 = vmatpush.msra.mxu0 %v537
    %557 = vmatpush.msra.mxu0 %v536
    %558 = vmatpush.msra.mxu0 %v535
    %559 = vmatpush.msra.mxu0 %v534
    %560 = vmatpush.msra.mxu0 %v533
    %561 = vmatpush.msra.mxu0 %v532
    %562 = vmatpush.msra.mxu0 %v531
    %563 = vmatpush.msra.mxu0 %v530
    %564 = vmatpush.msra.mxu0 %v529
    %565 = vmatmul.f32.gmra.mxu0 %v521
    %v566 = vpop.f32.mrf.mxu0
    %v567 = vadd.f32 %v547, %v566
    %568 = vmatmul.f32.gmra.mxu0 %v522
    %v569 = vpop.f32.mrf.mxu0
    %v570 = vadd.f32 %v547, %v569
    %571 = vmatmul.f32.gmra.mxu0 %v523
    %v572 = vpop.f32.mrf.mxu0
    %v573 = vadd.f32 %v547, %v572
    %574 = vmatmul.f32.gmra.mxu0 %v524
    %v575 = vpop.f32.mrf.mxu0
    %v576 = vadd.f32 %v547, %v575
    %577 = vmatmul.f32.gmra.mxu0 %v525
    %v578 = vpop.f32.mrf.mxu0
    %v579 = vadd.f32 %v547, %v578
    %580 = vmatmul.f32.gmra.mxu0 %v526
    %v581 = vpop.f32.mrf.mxu0
    %v582 = vadd.f32 %v547, %v581
    %583 = vmatmul.f32.gmra.mxu0 %v527
    %v584 = vpop.f32.mrf.mxu0
    %v585 = vadd.f32 %v547, %v584
    %586 = vmatmul.f32.gmra.mxu0 %v528
    %v587 = vpop.f32.mrf.mxu0
    %v588 = vadd.f32 %v547, %v587
    %589 = vdwg.mxu0
    %590 = vst [vmem:[#allocation2] sm:$0xff] %v567
    %591 = vst [vmem:[#allocation2 + $0x8] sm:$0xff] %v570
    %592 = vst [vmem:[#allocation2 + $0x10] sm:$0xff] %v573
    %593 = vst [vmem:[#allocation2 + $0x18] sm:$0xff] %v576
    %594 = vst [vmem:[#allocation2 + $0x20] sm:$0xff] %v579
    %595 = vst [vmem:[#allocation2 + $0x28] sm:$0xff] %v582
    %596 = vst [vmem:[#allocation2 + $0x30] sm:$0xff] %v585
    %597 = vst [vmem:[#allocation2 + $0x38] sm:$0xff] %v588
    %v598 = vld [vmem:[#allocation2] sm:$0xff]
    %v599 = vld [vmem:[#allocation9] sm:$0xff]
    %v600 = vld [vmem:[#allocation9 + $0x8] sm:$0xff]
    %v601 = vld [vmem:[#allocation9 + $0x10] sm:$0xff]
    %v602 = vld [vmem:[#allocation9 + $0x18] sm:$0xff]
    %v603 = vld [vmem:[#allocation9 + $0x20] sm:$0xff]
    %v604 = vld [vmem:[#allocation9 + $0x28] sm:$0xff]
    %v605 = vld [vmem:[#allocation9 + $0x30] sm:$0xff]
    %v606 = vld [vmem:[#allocation9 + $0x38] sm:$0xff]
    %v607 = vld [vmem:[#allocation9 + $0x40] sm:$0xff]
    %v608 = vld [vmem:[#allocation9 + $0x48] sm:$0xff]
    %v609 = vld [vmem:[#allocation9 + $0x50] sm:$0xff]
    %v610 = vld [vmem:[#allocation9 + $0x58] sm:$0xff]
    %v611 = vld [vmem:[#allocation9 + $0x60] sm:$0xff]
    %v612 = vld [vmem:[#allocation9 + $0x68] sm:$0xff]
    %v613 = vld [vmem:[#allocation9 + $0x70] sm:$0xff]
    %v614 = vld [vmem:[#allocation9 + $0x78] sm:$0xff]
    %615 = vmatpush.msra.mxu0 %v614
    %616 = vmatpush.msra.mxu0 %v613
    %617 = vmatpush.msra.mxu0 %v612
    %618 = vmatpush.msra.mxu0 %v611
    %619 = vmatpush.msra.mxu0 %v610
    %620 = vmatpush.msra.mxu0 %v609
    %621 = vmatpush.msra.mxu0 %v608
    %622 = vmatpush.msra.mxu0 %v607
    %623 = vmatpush.msra.mxu0 %v606
    %624 = vmatpush.msra.mxu0 %v605
    %625 = vmatpush.msra.mxu0 %v604
    %626 = vmatpush.msra.mxu0 %v603
    %627 = vmatpush.msra.mxu0 %v602
    %628 = vmatpush.msra.mxu0 %v601
    %629 = vmatpush.msra.mxu0 %v600
    %630 = vmatpush.msra.mxu0 %v599
    %631 = vmatmul.f32.gmra.mxu0 0.0
    %v632 = vpop.f32.mrf.mxu0
    %v633 = vadd.f32 0.0, %v632
    %634 = vdwg.mxu0
    %v635 = vadd.f32 %v598, %v633
    %v636 = vtanh.pop %v635
    %v637 = vld [vmem:[%s227] sm:$0xff]
    %638 = vmatpush.msra.mxu0 %v614
    %639 = vmatpush.msra.mxu0 %v613
    %640 = vmatpush.msra.mxu0 %v612
    %641 = vmatpush.msra.mxu0 %v611
    %642 = vmatpush.msra.mxu0 %v610
    %643 = vmatpush.msra.mxu0 %v609
    %644 = vmatpush.msra.mxu0 %v608
    %645 = vmatpush.msra.mxu0 %v607
    %646 = vmatpush.msra.mxu0 %v606
    %647 = vmatpush.msra.mxu0 %v605
    %648 = vmatpush.msra.mxu0 %v604
    %649 = vmatpush.msra.mxu0 %v603
    %650 = vmatpush.msra.mxu0 %v602
    %651 = vmatpush.msra.mxu0 %v601
    %652 = vmatpush.msra.mxu0 %v600
    %653 = vmatpush.msra.mxu0 %v599
    %654 = vmatmul.f32.gmra.mxu0 %v636
    %v655 = vpop.f32.mrf.mxu0
    %v656 = vadd.f32 0.0, %v655
    %657 = vdwg.mxu0
    %v658 = vadd.f32 %v637, %v656
    %v659 = vtanh.pop %v658
    %v660 = vld [vmem:[%s269] sm:$0xff]
    %661 = vmatpush.msra.mxu0 %v614
    %662 = vmatpush.msra.mxu0 %v613
    %663 = vmatpush.msra.mxu0 %v612
    %664 = vmatpush.msra.mxu0 %v611
    %665 = vmatpush.msra.mxu0 %v610
    %666 = vmatpush.msra.mxu0 %v609
    %667 = vmatpush.msra.mxu0 %v608
    %668 = vmatpush.msra.mxu0 %v607
    %669 = vmatpush.msra.mxu0 %v606
    %670 = vmatpush.msra.mxu0 %v605
    %671 = vmatpush.msra.mxu0 %v604
    %672 = vmatpush.msra.mxu0 %v603
    %673 = vmatpush.msra.mxu0 %v602
    %674 = vmatpush.msra.mxu0 %v601
    %675 = vmatpush.msra.mxu0 %v600
    %676 = vmatpush.msra.mxu0 %v599
    %677 = vmatmul.f32.gmra.mxu0 %v659
    %v678 = vpop.f32.mrf.mxu0
    %v679 = vadd.f32 0.0, %v678
    %680 = vdwg.mxu0
    %v681 = vadd.f32 %v660, %v679
    %v682 = vtanh.pop %v681
    %v683 = vld [vmem:[%s311] sm:$0xff]
    %684 = vmatpush.msra.mxu0 %v614
    %685 = vmatpush.msra.mxu0 %v613
    %686 = vmatpush.msra.mxu0 %v612
    %687 = vmatpush.msra.mxu0 %v611
    %688 = vmatpush.msra.mxu0 %v610
    %689 = vmatpush.msra.mxu0 %v609
    %690 = vmatpush.msra.mxu0 %v608
    %691 = vmatpush.msra.mxu0 %v607
    %692 = vmatpush.msra.mxu0 %v606
    %693 = vmatpush.msra.mxu0 %v605
    %694 = vmatpush.msra.mxu0 %v604
    %695 = vmatpush.msra.mxu0 %v603
    %696 = vmatpush.msra.mxu0 %v602
    %697 = vmatpush.msra.mxu0 %v601
    %698 = vmatpush.msra.mxu0 %v600
    %699 = vmatpush.msra.mxu0 %v599
    %700 = vmatmul.f32.gmra.mxu0 %v682
    %v701 = vpop.f32.mrf.mxu0
    %v702 = vadd.f32 0.0, %v701
    %703 = vdwg.mxu0
    %v704 = vadd.f32 %v683, %v702
    %v705 = vtanh.pop %v704
    %v706 = vld [vmem:[%s353] sm:$0xff]
    %707 = vmatpush.msra.mxu0 %v614
    %708 = vmatpush.msra.mxu0 %v613
    %709 = vmatpush.msra.mxu0 %v612
    %710 = vmatpush.msra.mxu0 %v611
    %711 = vmatpush.msra.mxu0 %v610
    %712 = vmatpush.msra.mxu0 %v609
    %713 = vmatpush.msra.mxu0 %v608
    %714 = vmatpush.msra.mxu0 %v607
    %715 = vmatpush.msra.mxu0 %v606
    %716 = vmatpush.msra.mxu0 %v605
    %717 = vmatpush.msra.mxu0 %v604
    %718 = vmatpush.msra.mxu0 %v603
    %719 = vmatpush.msra.mxu0 %v602
    %720 = vmatpush.msra.mxu0 %v601
    %721 = vmatpush.msra.mxu0 %v600
    %722 = vmatpush.msra.mxu0 %v599
    %723 = vmatmul.f32.gmra.mxu0 %v705
    %v724 = vpop.f32.mrf.mxu0
    %v725 = vadd.f32 0.0, %v724
    %726 = vdwg.mxu0
    %v727 = vadd.f32 %v706, %v725
    %v728 = vtanh.pop %v727
    %v729 = vld [vmem:[%s395] sm:$0xff]
    %730 = vmatpush.msra.mxu0 %v614
    %731 = vmatpush.msra.mxu0 %v613
    %732 = vmatpush.msra.mxu0 %v612
    %733 = vmatpush.msra.mxu0 %v611
    %734 = vmatpush.msra.mxu0 %v610
    %735 = vmatpush.msra.mxu0 %v609
    %736 = vmatpush.msra.mxu0 %v608
    %737 = vmatpush.msra.mxu0 %v607
    %738 = vmatpush.msra.mxu0 %v606
    %739 = vmatpush.msra.mxu0 %v605
    %740 = vmatpush.msra.mxu0 %v604
    %741 = vmatpush.msra.mxu0 %v603
    %742 = vmatpush.msra.mxu0 %v602
    %743 = vmatpush.msra.mxu0 %v601
    %744 = vmatpush.msra.mxu0 %v600
    %745 = vmatpush.msra.mxu0 %v599
    %746 = vmatmul.f32.gmra.mxu0 %v728
    %v747 = vpop.f32.mrf.mxu0
    %v748 = vadd.f32 0.0, %v747
    %749 = vdwg.mxu0
    %v750 = vadd.f32 %v729, %v748
    %v751 = vtanh.pop %v750
    %v752 = vld [vmem:[%s437] sm:$0xff]
    %753 = vmatpush.msra.mxu0 %v614
    %754 = vmatpush.msra.mxu0 %v613
    %755 = vmatpush.msra.mxu0 %v612
    %756 = vmatpush.msra.mxu0 %v611
    %757 = vmatpush.msra.mxu0 %v610
    %758 = vmatpush.msra.mxu0 %v609
    %759 = vmatpush.msra.mxu0 %v608
    %760 = vmatpush.msra.mxu0 %v607
    %761 = vmatpush.msra.mxu0 %v606
    %762 = vmatpush.msra.mxu0 %v605
    %763 = vmatpush.msra.mxu0 %v604
    %764 = vmatpush.msra.mxu0 %v603
    %765 = vmatpush.msra.mxu0 %v602
    %766 = vmatpush.msra.mxu0 %v601
    %767 = vmatpush.msra.mxu0 %v600
    %768 = vmatpush.msra.mxu0 %v599
    %769 = vmatmul.f32.gmra.mxu0 %v751
    %v770 = vpop.f32.mrf.mxu0
    %v771 = vadd.f32 0.0, %v770
    %772 = vdwg.mxu0
    %v773 = vadd.f32 %v752, %v771
    %v774 = vtanh.pop %v773
    %v775 = vld [vmem:[%s479] sm:$0xff]
    %776 = vmatpush.msra.mxu0 %v614
    %777 = vmatpush.msra.mxu0 %v613
    %778 = vmatpush.msra.mxu0 %v612
    %779 = vmatpush.msra.mxu0 %v611
    %780 = vmatpush.msra.mxu0 %v610
    %781 = vmatpush.msra.mxu0 %v609
    %782 = vmatpush.msra.mxu0 %v608
    %783 = vmatpush.msra.mxu0 %v607
    %784 = vmatpush.msra.mxu0 %v606
    %785 = vmatpush.msra.mxu0 %v605
    %786 = vmatpush.msra.mxu0 %v604
    %787 = vmatpush.msra.mxu0 %v603
    %788 = vmatpush.msra.mxu0 %v602
    %789 = vmatpush.msra.mxu0 %v601
    %790 = vmatpush.msra.mxu0 %v600
    %791 = vmatpush.msra.mxu0 %v599
    %792 = vmatmul.f32.gmra.mxu0 %v774
    %v793 = vpop.f32.mrf.mxu0
    %v794 = vadd.f32 0.0, %v793
    %795 = vdwg.mxu0
    %v796 = vadd.f32 %v775, %v794
    %v797 = vtanh.pop %v796
    %v798 = vld [vmem:[#allocation11] sm:$0xff]
    %v799 = vld [vmem:[#allocation11 + $0x8] sm:$0xff]
    %v800 = vld [vmem:[#allocation11 + $0x10] sm:$0xff]
    %v801 = vld [vmem:[#allocation11 + $0x18] sm:$0xff]
    %v802 = vld [vmem:[#allocation11 + $0x20] sm:$0xff]
    %v803 = vld [vmem:[#allocation11 + $0x28] sm:$0xff]
    %v804 = vld [vmem:[#allocation11 + $0x30] sm:$0xff]
    %v805 = vld [vmem:[#allocation11 + $0x38] sm:$0xff]
    %v806 = vld [vmem:[#allocation11 + $0x40] sm:$0xff]
    %v807 = vld [vmem:[#allocation11 + $0x48] sm:$0xff]
    %v808 = vld [vmem:[#allocation11 + $0x50] sm:$0xff]
    %v809 = vld [vmem:[#allocation11 + $0x58] sm:$0xff]
    %v810 = vld [vmem:[#allocation11 + $0x60] sm:$0xff]
    %v811 = vld [vmem:[#allocation11 + $0x68] sm:$0xff]
    %v812 = vld [vmem:[#allocation11 + $0x70] sm:$0xff]
    %v813 = vld [vmem:[#allocation11 + $0x78] sm:$0xff]
    %v814 = vld [vmem:[%s8] sm:$0x1]
    %v816 = vperm.slane %v814, 0
    %818 = vmatpush.msra.mxu0 %v813
    %819 = vmatpush.msra.mxu0 %v812
    %820 = vmatpush.msra.mxu0 %v811
    %821 = vmatpush.msra.mxu0 %v810
    %822 = vmatpush.msra.mxu0 %v809
    %823 = vmatpush.msra.mxu0 %v808
    %824 = vmatpush.msra.mxu0 %v807
    %825 = vmatpush.msra.mxu0 %v806
    %826 = vmatpush.msra.mxu0 %v805
    %827 = vmatpush.msra.mxu0 %v804
    %828 = vmatpush.msra.mxu0 %v803
    %829 = vmatpush.msra.mxu0 %v802
    %830 = vmatpush.msra.mxu0 %v801
    %831 = vmatpush.msra.mxu0 %v800
    %832 = vmatpush.msra.mxu0 %v799
    %833 = vmatpush.msra.mxu0 %v798
    %834 = vmatmul.f32.gmra.mxu0 %v797
    %v835 = vpop.f32.mrf.mxu0
    %v836 = vadd.f32 %v816, %v835
    %837 = vdwg.mxu0
    %v838 = vadd.f32 %v836, 1.0
    %v839 = vmul.f32 %v838, 0.5
    %840 = vst [vmem:[%s9] sm:$0xff] %v839
    // Predicated region
    $region58: #{cursor_rnn_forward.1} parent=1 // pred_check
      _
    $region59: #{cursor_rnn_forward.1} parent=1 // pred_check_branch
      %842 = sbr.rel (0) target = $region61
    $region60: #{cursor_rnn_forward.1} parent=1 // pred_region
      _
    $region61: #{cursor_rnn_forward.1} parent=1 // pred_fallthru
      _
    // Predicated region
    $region62: #{cursor_rnn_forward.1} parent=1 // pred_check
      _
    $region63: #{cursor_rnn_forward.1} parent=1 // pred_check_branch
      %844 = sbr.rel (0) target = $region65
    $region64: #{cursor_rnn_forward.1} parent=1 // pred_region
      _
    $region65: #{cursor_rnn_forward.1} parent=1 // pred_fallthru
      _
    %845 = vsyncpa [#allocation5], 1
    %846 = vsyncpa [#allocation7], 1
    %847 = vsyncpa [#allocation10], 1

</llo_original>
